<compile_context>
chip_gen: v6e
topology: v6e:2x2x1
jax: 0.10.0
libtpu: 0.0.40
codegen_flags: <defaults>
</compile_context>

<pallas_src>
import jax
import jax.numpy as jnp
from jax.experimental import pallas as pl
from jax.experimental.pallas import tpu as pltpu

IM_DIM = 784
HIDDEN = 128          # hidden_dim; layer widths are 4*H, 2*H, H, 1
NEG_SLOPE = 0.2


def _leaky_relu(x):
    # LeakyReLU(0.2) == max(x, 0.2*x): mul+max (2 VALU ops) vs cmp+sel+mul (3).
    return jnp.maximum(x, NEG_SLOPE * x)


def _round_up(n, m):
    return ((n + m - 1) // m) * m


def discriminator_kernel(x_ref,
                         w1_ref, b1_ref,
                         w2_ref, b2_ref,
                         w3_ref, b3_ref,
                         w4_ref, b4_ref,
                         o_ref):
    # x tile arrives as f32 straight from HBM; cast to bf16 in-kernel so the
    # wrapper never does a separate HBM cast pass.
    x = x_ref[...].astype(jnp.bfloat16)

    h = jnp.dot(x, w1_ref[...], preferred_element_type=jnp.float32)
    h = _leaky_relu(h + b1_ref[...])                 # f32 bias + LeakyReLU (VPU)

    h = jnp.dot(h.astype(jnp.bfloat16), w2_ref[...],
                preferred_element_type=jnp.float32)
    h = _leaky_relu(h + b2_ref[...])

    h = jnp.dot(h.astype(jnp.bfloat16), w3_ref[...],
                preferred_element_type=jnp.float32)
    h = _leaky_relu(h + b3_ref[...])

    # Final Linear(128 -> 1), emitted lane-dense: contract the feature axis so
    # the batch lands on the lane axis -> (1, TB) row, unmasked full-lane
    # stores instead of a masked (TB, 1) column writeback. Cost on the MXU is
    # ~0.02% of the main matmuls.
    logits = jnp.einsum('ok,bk->ob', w4_ref[...], h,
                        preferred_element_type=jnp.float32)     # (1, TB) f32
    logits = logits + b4_ref[...]                               # (1,1) broadcast
    o_ref[...] = logits.reshape(o_ref.shape).astype(o_ref.dtype)  # (1, 1, TB)


def prepare_params(params):
    """One-time conversion of f32 params [(W=(in,out), b=(1,out)) x 4] into the
    kernel-ready layout: bf16 weights for the three MXU layers, f32 biases,
    and the final layer as a (1, 128) f32 row + (1, 1) bias."""
    (w1, b1), (w2, b2), (w3, b3), (w4, b4) = params
    return (w1.astype(jnp.bfloat16), b1.astype(jnp.float32),
            w2.astype(jnp.bfloat16), b2.astype(jnp.float32),
            w3.astype(jnp.bfloat16), b3.astype(jnp.float32),
            w4.reshape(1, HIDDEN).astype(jnp.float32),
            b4.reshape(1, 1).astype(jnp.float32))


def discriminator_forward(x, prepared_params, *, tile_b=512):
    """x: (B, IM_DIM) float32. prepared_params: output of prepare_params()."""
    B = x.shape[0]
    x = x.astype(jnp.float32)   # no-op for f32 inputs

    # Batch tile: multiple of 16 (clean (16,128) bf16 packing for the MXU LHS),
    # capped at tile_b, and small enough that the grid has >=2 steps whenever B
    # allows it so v7x's two TensorCores both get work.
    TB = min(tile_b, _round_up(max(1, -(-B // 2)), 16))
    num_tiles = -(-B // TB)
    B_pad = num_tiles * TB
    if B_pad != B:
        # Only triggered for batches not divisible by TB (e.g. tiny demo batch).
        x = jnp.pad(x, ((0, B_pad - B), (0, 0)))

    w1b, b1, w2b, b2, w3b, b3, w4r, b4r = prepared_params

    # Constant index_map -> weights/biases stay VMEM-resident across grid steps.
    resident = lambda a: pl.BlockSpec(a.shape, lambda i: (0, 0))

    out = pl.pallas_call(
        discriminator_kernel,
        out_shape=jax.ShapeDtypeStruct((num_tiles, 1, TB), jnp.float32),
        grid_spec=pltpu.PrefetchScalarGridSpec(
            num_scalar_prefetch=0,
            grid=(num_tiles,),
            in_specs=[pl.BlockSpec((TB, IM_DIM), lambda i: (i, 0)),
                      resident(w1b), resident(b1),
                      resident(w2b), resident(b2),
                      resident(w3b), resident(b3),
                      resident(w4r), resident(b4r)],
            out_specs=pl.BlockSpec((1, 1, TB), lambda i: (i, 0, 0)),
        ),
        compiler_params=pltpu.CompilerParams(
            dimension_semantics=("parallel",),        # shard batch tiles across v7x's 2 TCs
            vmem_limit_bytes=48 * 1024 * 1024),       # headroom for TB up to ~1024
    )(x, w1b, b1, w2b, b2, w3b, b3, w4r, b4r)

    return out.reshape(B_pad, 1)[:B]


def init_params(key, im_dim=IM_DIM, hidden_dim=HIDDEN):
    dims = [im_dim, hidden_dim * 4, hidden_dim * 2, hidden_dim, 1]
    params = []
    for i in range(4):
        key, kw, kb = jax.random.split(key, 3)
        fan_in = dims[i]
        scale = 1.0 / jnp.sqrt(fan_in)
        w = jax.random.uniform(kw, (dims[i], dims[i + 1]), jnp.float32,
                               minval=-scale, maxval=scale)
        b = jax.random.uniform(kb, (1, dims[i + 1]), jnp.float32,
                               minval=-scale, maxval=scale)
        params.append((w, b))
    return params


def reference_forward(x, params):
    """Pure-JAX reference mirroring the kernel's bf16-operand / f32-accumulate numerics."""
    (w1, b1), (w2, b2), (w3, b3), (w4, b4) = params
    bf = lambda a: a.astype(jnp.bfloat16).astype(jnp.float32)
    hp = jax.lax.Precision.HIGHEST
    h = bf(x)
    h = _leaky_relu(jnp.dot(h, bf(w1), precision=hp) + b1)
    h = _leaky_relu(jnp.dot(bf(h), bf(w2), precision=hp) + b2)
    h = _leaky_relu(jnp.dot(bf(h), bf(w3), precision=hp) + b3)
    return jnp.dot(h, w4, precision=hp) + b4


if __name__ == "__main__":
    key = jax.random.PRNGKey(0)
    k_params, k_x = jax.random.split(key)

    params = init_params(k_params)
    prepared = prepare_params(params)

    batch = 8
    x = jax.random.normal(k_x, (batch, IM_DIM), jnp.float32)

    out = discriminator_forward(x, prepared)
    out = jax.block_until_ready(out)

    ref = reference_forward(x, params)
    assert out.shape == (batch, 1), out.shape
    assert jnp.allclose(out, ref, atol=2e-3, rtol=2e-3), "mismatch vs reference"

    print("KERNEL_OK")
</pallas_src>

<mosaic_0001>
module attributes {stable_mosaic.version = 11 : i64} {
  func.func @discriminator_kernel(%arg0: i32, %arg1: memref<16x784xf32, #tpu.memory_space<vmem>>, %arg2: memref<784x512xbf16, #tpu.memory_space<vmem>>, %arg3: memref<1x512xf32, #tpu.memory_space<vmem>>, %arg4: memref<512x256xbf16, #tpu.memory_space<vmem>>, %arg5: memref<1x256xf32, #tpu.memory_space<vmem>>, %arg6: memref<256x128xbf16, #tpu.memory_space<vmem>>, %arg7: memref<1x128xf32, #tpu.memory_space<vmem>>, %arg8: memref<1x128xf32, #tpu.memory_space<vmem>>, %arg9: memref<1x1xf32, #tpu.memory_space<vmem>>, %arg10: memref<1x1x16xf32, #tpu.memory_space<vmem>>) attributes {dimension_semantics = [#tpu.dimension_semantics<parallel>], iteration_bounds = array<i64: 1>, scalar_prefetch = 0 : i64, scratch_operands = 0 : i64, tpu.core_type = #tpu.core_type<tc>, window_params = [{transform_indices = @transform_0, window_bounds = array<i64: 16, 784>}, {pipeline_mode = #tpu.pipeline_mode<synchronous>, transform_indices = @transform_1, window_bounds = array<i64: 784, 512>}, {pipeline_mode = #tpu.pipeline_mode<synchronous>, transform_indices = @transform_2, window_bounds = array<i64: 1, 512>}, {pipeline_mode = #tpu.pipeline_mode<synchronous>, transform_indices = @transform_3, window_bounds = array<i64: 512, 256>}, {pipeline_mode = #tpu.pipeline_mode<synchronous>, transform_indices = @transform_4, window_bounds = array<i64: 1, 256>}, {pipeline_mode = #tpu.pipeline_mode<synchronous>, transform_indices = @transform_5, window_bounds = array<i64: 256, 128>}, {pipeline_mode = #tpu.pipeline_mode<synchronous>, transform_indices = @transform_6, window_bounds = array<i64: 1, 128>}, {pipeline_mode = #tpu.pipeline_mode<synchronous>, transform_indices = @transform_7, window_bounds = array<i64: 1, 128>}, {pipeline_mode = #tpu.pipeline_mode<synchronous>, transform_indices = @transform_8, window_bounds = array<i64: 1, 1>}, {transform_indices = @transform_9, window_bounds = array<i64: 1, 1, 16>}]} {
    %c0 = arith.constant 0 : index
    %c0_0 = arith.constant 0 : index
    %0 = vector.load %arg1[%c0, %c0_0] : memref<16x784xf32, #tpu.memory_space<vmem>>, vector<16x784xf32>
    %1 = arith.truncf %0 : vector<16x784xf32> to vector<16x784xbf16>
    %c0_1 = arith.constant 0 : index
    %c0_2 = arith.constant 0 : index
    %2 = vector.load %arg2[%c0_1, %c0_2] : memref<784x512xbf16, #tpu.memory_space<vmem>>, vector<784x512xbf16>
    %cst = arith.constant dense<0.000000e+00> : vector<16x512xf32>
    %3 = tpu.matmul %1, %2, %cst {dimension_numbers = #tpu.dot_dimension_numbers<[1], [0], [0], [1], [0, 0, 1, 1], [], []>} : vector<16x784xbf16>, vector<784x512xbf16>, vector<16x512xf32> -> vector<16x512xf32>
    %c0_3 = arith.constant 0 : index
    %c0_4 = arith.constant 0 : index
    %4 = vector.load %arg3[%c0_3, %c0_4] : memref<1x512xf32, #tpu.memory_space<vmem>>, vector<1x512xf32>
    %5 = vector.broadcast %4 : vector<1x512xf32> to vector<16x512xf32>
    %6 = arith.addf %3, %5 : vector<16x512xf32>
    %cst_5 = arith.constant 2.000000e-01 : f32
    %7 = vector.broadcast %cst_5 : f32 to vector<16x512xf32>
    %8 = arith.mulf %7, %6 : vector<16x512xf32>
    %9 = arith.maximumf %6, %8 : vector<16x512xf32>
    %10 = arith.truncf %9 : vector<16x512xf32> to vector<16x512xbf16>
    %c0_6 = arith.constant 0 : index
    %c0_7 = arith.constant 0 : index
    %11 = vector.load %arg4[%c0_6, %c0_7] : memref<512x256xbf16, #tpu.memory_space<vmem>>, vector<512x256xbf16>
    %cst_8 = arith.constant dense<0.000000e+00> : vector<16x256xf32>
    %12 = tpu.matmul %10, %11, %cst_8 {dimension_numbers = #tpu.dot_dimension_numbers<[1], [0], [0], [1], [0, 0, 1, 1], [], []>} : vector<16x512xbf16>, vector<512x256xbf16>, vector<16x256xf32> -> vector<16x256xf32>
    %c0_9 = arith.constant 0 : index
    %c0_10 = arith.constant 0 : index
    %13 = vector.load %arg5[%c0_9, %c0_10] : memref<1x256xf32, #tpu.memory_space<vmem>>, vector<1x256xf32>
    %14 = vector.broadcast %13 : vector<1x256xf32> to vector<16x256xf32>
    %15 = arith.addf %12, %14 : vector<16x256xf32>
    %cst_11 = arith.constant 2.000000e-01 : f32
    %16 = vector.broadcast %cst_11 : f32 to vector<16x256xf32>
    %17 = arith.mulf %16, %15 : vector<16x256xf32>
    %18 = arith.maximumf %15, %17 : vector<16x256xf32>
    %19 = arith.truncf %18 : vector<16x256xf32> to vector<16x256xbf16>
    %c0_12 = arith.constant 0 : index
    %c0_13 = arith.constant 0 : index
    %20 = vector.load %arg6[%c0_12, %c0_13] : memref<256x128xbf16, #tpu.memory_space<vmem>>, vector<256x128xbf16>
    %cst_14 = arith.constant dense<0.000000e+00> : vector<16x128xf32>
    %21 = tpu.matmul %19, %20, %cst_14 {dimension_numbers = #tpu.dot_dimension_numbers<[1], [0], [0], [1], [0, 0, 1, 1], [], []>} : vector<16x256xbf16>, vector<256x128xbf16>, vector<16x128xf32> -> vector<16x128xf32>
    %c0_15 = arith.constant 0 : index
    %c0_16 = arith.constant 0 : index
    %22 = vector.load %arg7[%c0_15, %c0_16] : memref<1x128xf32, #tpu.memory_space<vmem>>, vector<1x128xf32>
    %23 = vector.broadcast %22 : vector<1x128xf32> to vector<16x128xf32>
    %24 = arith.addf %21, %23 : vector<16x128xf32>
    %cst_17 = arith.constant 2.000000e-01 : f32
    %25 = vector.broadcast %cst_17 : f32 to vector<16x128xf32>
    %26 = arith.mulf %25, %24 : vector<16x128xf32>
    %27 = arith.maximumf %24, %26 : vector<16x128xf32>
    %c0_18 = arith.constant 0 : index
    %c0_19 = arith.constant 0 : index
    %28 = vector.load %arg8[%c0_18, %c0_19] : memref<1x128xf32, #tpu.memory_space<vmem>>, vector<1x128xf32>
    "tpu.trace_start"() <{level = 10 : i32, message = "ok,bk->ob"}> : () -> ()
    %cst_20 = arith.constant dense<0.000000e+00> : vector<1x16xf32>
    %29 = tpu.matmul %28, %27, %cst_20 {dimension_numbers = #tpu.dot_dimension_numbers<[1], [1], [0], [0], [0, 0, 1, 0], [], []>} : vector<1x128xf32>, vector<16x128xf32>, vector<1x16xf32> -> vector<1x16xf32>
    "tpu.trace_stop"() : () -> ()
    %c0_21 = arith.constant 0 : index
    %c0_22 = arith.constant 0 : index
    %30 = vector.load %arg9[%c0_21, %c0_22] : memref<1x1xf32, #tpu.memory_space<vmem>>, vector<1x1xf32>
    %31 = vector.broadcast %30 : vector<1x1xf32> to vector<1x16xf32>
    %32 = arith.addf %29, %31 : vector<1x16xf32>
    %33 = vector.shape_cast %32 : vector<1x16xf32> to vector<1x1x16xf32>
    %c0_23 = arith.constant 0 : index
    %c0_24 = arith.constant 0 : index
    %c0_25 = arith.constant 0 : index
    %34 = vector.load %arg10[%c0_23, %c0_24, %c0_25] : memref<1x1x16xf32, #tpu.memory_space<vmem>>, vector<1x1x16xf32>
    tpu.vector_store %arg10[%c0_23, %c0_24, %c0_25], %33 {strides = array<i32>} : memref<1x1x16xf32, #tpu.memory_space<vmem>>, vector<1x1x16xf32>,
    return
  }
  func.func @transform_0(%arg0: i32) -> (i32, i32) {
    %c0_i32 = arith.constant 0 : i32
    %c0_i32_0 = arith.constant 0 : i32
    return %arg0, %c0_i32 : i32, i32
  }
  func.func @transform_1(%arg0: i32) -> (i32, i32) {
    %c0_i32 = arith.constant 0 : i32
    %c0_i32_0 = arith.constant 0 : i32
    %c0_i32_1 = arith.constant 0 : i32
    return %c0_i32, %c0_i32_0 : i32, i32
  }
  func.func @transform_2(%arg0: i32) -> (i32, i32) {
    %c0_i32 = arith.constant 0 : i32
    %c0_i32_0 = arith.constant 0 : i32
    %c0_i32_1 = arith.constant 0 : i32
    return %c0_i32, %c0_i32_0 : i32, i32
  }
  func.func @transform_3(%arg0: i32) -> (i32, i32) {
    %c0_i32 = arith.constant 0 : i32
    %c0_i32_0 = arith.constant 0 : i32
    %c0_i32_1 = arith.constant 0 : i32
    return %c0_i32, %c0_i32_0 : i32, i32
  }
  func.func @transform_4(%arg0: i32) -> (i32, i32) {
    %c0_i32 = arith.constant 0 : i32
    %c0_i32_0 = arith.constant 0 : i32
    %c0_i32_1 = arith.constant 0 : i32
    return %c0_i32, %c0_i32_0 : i32, i32
  }
  func.func @transform_5(%arg0: i32) -> (i32, i32) {
    %c0_i32 = arith.constant 0 : i32
    %c0_i32_0 = arith.constant 0 : i32
    %c0_i32_1 = arith.constant 0 : i32
    return %c0_i32, %c0_i32_0 : i32, i32
  }
  func.func @transform_6(%arg0: i32) -> (i32, i32) {
    %c0_i32 = arith.constant 0 : i32
    %c0_i32_0 = arith.constant 0 : i32
    %c0_i32_1 = arith.constant 0 : i32
    return %c0_i32, %c0_i32_0 : i32, i32
  }
  func.func @transform_7(%arg0: i32) -> (i32, i32) {
    %c0_i32 = arith.constant 0 : i32
    %c0_i32_0 = arith.constant 0 : i32
    %c0_i32_1 = arith.constant 0 : i32
    return %c0_i32, %c0_i32_0 : i32, i32
  }
  func.func @transform_8(%arg0: i32) -> (i32, i32) {
    %c0_i32 = arith.constant 0 : i32
    %c0_i32_0 = arith.constant 0 : i32
    %c0_i32_1 = arith.constant 0 : i32
    return %c0_i32, %c0_i32_0 : i32, i32
  }
  func.func @transform_9(%arg0: i32) -> (i32, i32, i32) {
    %c0_i32 = arith.constant 0 : i32
    %c0_i32_0 = arith.constant 0 : i32
    %c0_i32_1 = arith.constant 0 : i32
    return %arg0, %c0_i32, %c0_i32_0 : i32, i32, i32
  }
}

</mosaic_0001>

<llo_original>
// kernel: tpu_custom_call.1
$region0: #{tpu_custom_call.1}
  #allocation0 [shape = 'u32[]', space=smem, size = 0x4, offset = 0x4, fixed_abs, tag = 'smem constant byte address 0x4 - core index']
  #allocation1 [shape = 'u32[144,128]{1,0:T(1,128)}', space=vmem, size = 0x12000, scoped, tag = 'internal scratch']
  #allocation2 [shape = 'f32[1,1]{1,0:T(1,128)S(1)}', space=vmem, size = 0x200, scoped, tag = 'scoped memory for tpu_custom_call.1']
  %s0 = inlined_call_operand.hbm [shape: f32[16,784], index: 0, kind: input, shape index: {}]
  %s1 = inlined_call_operand.hbm [shape: bf16[784,512], index: 1, kind: input, shape index: {}]
  %s2 = inlined_call_operand.vmem [shape: f32[1,512], index: 2, kind: input, shape index: {}]
  %s3 = inlined_call_operand.hbm [shape: bf16[512,256], index: 3, kind: input, shape index: {}]
  %s4 = inlined_call_operand.vmem [shape: f32[1,256], index: 4, kind: input, shape index: {}]
  %s5 = inlined_call_operand.hbm [shape: bf16[256,128], index: 5, kind: input, shape index: {}]
  %s6 = inlined_call_operand.vmem [shape: f32[1,128], index: 6, kind: input, shape index: {}]
  %s7 = inlined_call_operand.vmem [shape: f32[1,128], index: 7, kind: input, shape index: {}]
  %s8 = inlined_call_operand.<no memory space> [shape: f32[1,1], index: 8, kind: input, shape index: {}]
  %s9 = inlined_call_operand.hbm [shape: f32[1,1,16], index: 9, kind: output, shape index: {}]
  %s10 = sld [smem:[#allocation0]]
  $region62: #{tpu_custom_call.1} parent=0
    _
  %s12 = ssub.s32 1, %s10
  %s13 = scalar_select 0, %s12, %s10
  %v14 = vstv %s8
  %15 = vst [vmem:[#allocation2] sm:$0x1] %v14
  $region1: #{tpu_custom_call.1} parent=0
    #allocation3 [shape = 'u8[57344]{0}', space=vmem, size = 0xe000, scoped, tag = 'input window, operand 0, single buffered']
    #allocation4 [shape = 's32[1]{0}', space=sflag, size = 0x4, scoped, tag = 'scoped memory for tpu_custom_call.1']
    #allocation5 [shape = 's32[1]{0}', space=sflag, size = 0x4, scoped, tag = 'scoped memory for tpu_custom_call.1']
    #allocation6 [shape = 'u8[802816]{0}', space=vmem, size = 0xc4000, scoped, tag = 'input window, operand 1, single buffered']
    #allocation7 [shape = 's32[1]{0}', space=sflag, size = 0x4, scoped, tag = 'scoped memory for tpu_custom_call.1']
    #allocation8 [shape = 'u8[262144]{0}', space=vmem, size = 0x40000, scoped, tag = 'input window, operand 3, single buffered']
    #allocation9 [shape = 'u8[65536]{0}', space=vmem, size = 0x10000, scoped, tag = 'input window, operand 5, single buffered']
    #allocation10 [shape = 's32[1]{0}', space=sflag, size = 0x4, scoped, tag = 'scoped memory for tpu_custom_call.1']
    #allocation11 [shape = 'u8[512]{0}', space=vmem, size = 0x400, scoped, tag = 'output window, operand 0, single buffered']
    %16 = vsyncpa [#allocation4], 0
    %17 = vsyncpa [#allocation7], 0
    %18 = vsyncpa [#allocation10], 0
    %19 = vsyncpa [#allocation5], 0
    // Predicated region
    $region2: #{tpu_custom_call.1} parent=1 // pred_check
      _
    $region3: #{tpu_custom_call.1} parent=1 // pred_check_branch
      %21 = sbr.rel (0) target = $region5
    $region4: #{tpu_custom_call.1} parent=1 // pred_region
      %s23 = ssub.s32 1792, 1792
      %24 = vsyncadd [#allocation4], %s23
      %s25 = sshll.u32 [#allocation3], 4
      %s26 = int_to_ptr.vmem [resolvable:$true] %s25
      %31 = dma.hbm_to_vmem [thread:$0]  %s0, 1792, %s26, [#allocation4], 896, 896, 56
    $region5: #{tpu_custom_call.1} parent=1 // pred_fallthru
      _
    // Predicated region
    $region6: #{tpu_custom_call.1} parent=1 // pred_check
      _
    $region7: #{tpu_custom_call.1} parent=1 // pred_check_branch
      %33 = sbr.rel (0) target = $region9
    $region8: #{tpu_custom_call.1} parent=1 // pred_region
      %s35 = ssub.s32 25088, 25088
      %36 = vsyncadd [#allocation7], %s35
      %s37 = sshll.u32 [#allocation6], 4
      %s38 = int_to_ptr.vmem [resolvable:$true] %s37
      %43 = dma.hbm_to_vmem [thread:$0]  %s1, 25088, %s38, [#allocation7], 256, 256, 16
    $region9: #{tpu_custom_call.1} parent=1 // pred_fallthru
      _
    // Predicated region
    $region10: #{tpu_custom_call.1} parent=1 // pred_check
      _
    $region11: #{tpu_custom_call.1} parent=1 // pred_check_branch
      %45 = sbr.rel (0) target = $region13
    $region12: #{tpu_custom_call.1} parent=1 // pred_region
      _
    $region13: #{tpu_custom_call.1} parent=1 // pred_fallthru
      _
    // Predicated region
    $region14: #{tpu_custom_call.1} parent=1 // pred_check
      _
    $region15: #{tpu_custom_call.1} parent=1 // pred_check_branch
      %47 = sbr.rel (0) target = $region17
    $region16: #{tpu_custom_call.1} parent=1 // pred_region
      %s49 = ssub.s32 8192, 8192
      %50 = vsyncadd [#allocation7], %s49
      %s51 = sshll.u32 [#allocation8], 4
      %s52 = int_to_ptr.vmem [resolvable:$true] %s51
      %57 = dma.hbm_to_vmem [thread:$0]  %s3, 8192, %s52, [#allocation7], 128, 128, 8
    $region17: #{tpu_custom_call.1} parent=1 // pred_fallthru
      _
    // Predicated region
    $region18: #{tpu_custom_call.1} parent=1 // pred_check
      _
    $region19: #{tpu_custom_call.1} parent=1 // pred_check_branch
      %59 = sbr.rel (0) target = $region21
    $region20: #{tpu_custom_call.1} parent=1 // pred_region
      _
    $region21: #{tpu_custom_call.1} parent=1 // pred_fallthru
      _
    // Predicated region
    $region22: #{tpu_custom_call.1} parent=1 // pred_check
      _
    $region23: #{tpu_custom_call.1} parent=1 // pred_check_branch
      %61 = sbr.rel (0) target = $region25
    $region24: #{tpu_custom_call.1} parent=1 // pred_region
      %s63 = ssub.s32 2048, 2048
      %64 = vsyncadd [#allocation10], %s63
      %s65 = sshll.u32 [#allocation9], 4
      %s66 = int_to_ptr.vmem [resolvable:$true] %s65
      %71 = dma.hbm_to_vmem [thread:$0]  %s5, 2048, %s66, [#allocation10], 64, 64, 4
    $region25: #{tpu_custom_call.1} parent=1 // pred_fallthru
      _
    // Predicated region
    $region26: #{tpu_custom_call.1} parent=1 // pred_check
      _
    $region27: #{tpu_custom_call.1} parent=1 // pred_check_branch
      %73 = sbr.rel (0) target = $region29
    $region28: #{tpu_custom_call.1} parent=1 // pred_region
      _
    $region29: #{tpu_custom_call.1} parent=1 // pred_fallthru
      _
    // Predicated region
    $region30: #{tpu_custom_call.1} parent=1 // pred_check
      _
    $region31: #{tpu_custom_call.1} parent=1 // pred_check_branch
      %75 = sbr.rel (0) target = $region33
    $region32: #{tpu_custom_call.1} parent=1 // pred_region
      _
    $region33: #{tpu_custom_call.1} parent=1 // pred_fallthru
      _
    // Predicated region
    $region34: #{tpu_custom_call.1} parent=1 // pred_check
      _
    $region35: #{tpu_custom_call.1} parent=1 // pred_check_branch
      %77 = sbr.rel (0) target = $region37
    $region36: #{tpu_custom_call.1} parent=1 // pred_region
      _
    $region37: #{tpu_custom_call.1} parent=1 // pred_fallthru
      _
    // Predicated region
    $region38: #{tpu_custom_call.1} parent=1 // pred_check
      _
    $region39: #{tpu_custom_call.1} parent=1 // pred_check_branch
      %79 = sbr.rel (0) target = $region41
    $region40: #{tpu_custom_call.1} parent=1 // pred_region
      %80 = dma.done [#allocation4], 1792
    $region41: #{tpu_custom_call.1} parent=1 // pred_fallthru
      _
    // Predicated region
    $region42: #{tpu_custom_call.1} parent=1 // pred_check
      _
    $region43: #{tpu_custom_call.1} parent=1 // pred_check_branch
      %82 = sbr.rel (0) target = $region45
    $region44: #{tpu_custom_call.1} parent=1 // pred_region
      %83 = dma.done [#allocation7], 25088
    $region45: #{tpu_custom_call.1} parent=1 // pred_fallthru
      _
    // Predicated region
    $region46: #{tpu_custom_call.1} parent=1 // pred_check
      _
    $region47: #{tpu_custom_call.1} parent=1 // pred_check_branch
      %85 = sbr.rel (0) target = $region49
    $region48: #{tpu_custom_call.1} parent=1 // pred_region
      %86 = dma.done [#allocation7], 8192
    $region49: #{tpu_custom_call.1} parent=1 // pred_fallthru
      _
    // Predicated region
    $region50: #{tpu_custom_call.1} parent=1 // pred_check
      _
    $region51: #{tpu_custom_call.1} parent=1 // pred_check_branch
      %88 = sbr.rel (0) target = $region53
    $region52: #{tpu_custom_call.1} parent=1 // pred_region
      %89 = dma.done [#allocation10], 2048
    $region53: #{tpu_custom_call.1} parent=1 // pred_fallthru
      _
    %v91 = vld [vmem:[#allocation3] sm:$0xff]
    %v92 = vld [vmem:[#allocation3 + $0x8] sm:$0xff]
    %v93 = vld [vmem:[#allocation3 + $0x10] sm:$0xff]
    %v94 = vld [vmem:[#allocation3 + $0x18] sm:$0xff]
    %v95 = vld [vmem:[#allocation3 + $0x20] sm:$0xff]
    %v96 = vld [vmem:[#allocation3 + $0x28] sm:$0xff]
    %v97 = vld [vmem:[#allocation3 + $0x30] sm:$0xff]
    %v98 = vld [vmem:[#allocation3 + $0x38] sm:$0xff]
    %v99 = vld [vmem:[#allocation3 + $0x40] sm:$0xff]
    %v100 = vld [vmem:[#allocation3 + $0x48] sm:$0xff]
    %v101 = vld [vmem:[#allocation3 + $0x50] sm:$0xff]
    %v102 = vld [vmem:[#allocation3 + $0x58] sm:$0xff]
    %v103 = vld [vmem:[#allocation3 + $0x60] sm:$0xff]
    %v104 = vld [vmem:[#allocation3 + $0x68] sm:$0xff]
    %v105 = vpack.c.bf16 %v98, %v91
    %v106 = vpack.c.bf16 %v99, %v92
    %v107 = vpack.c.bf16 %v100, %v93
    %v108 = vpack.c.bf16 %v101, %v94
    %v109 = vpack.c.bf16 %v102, %v95
    %v110 = vpack.c.bf16 %v103, %v96
    %v111 = vpack.c.bf16 %v104, %v97
    %v112 = vld [vmem:[#allocation6] sm:$0xff]
    %v113 = vld [vmem:[#allocation6 + $0x8] sm:$0xff]
    %v114 = vld [vmem:[#allocation6 + $0x10] sm:$0xff]
    %v115 = vld [vmem:[#allocation6 + $0x18] sm:$0xff]
    %v116 = vld [vmem:[#allocation6 + $0x20] sm:$0xff]
    %v117 = vld [vmem:[#allocation6 + $0x28] sm:$0xff]
    %v118 = vld [vmem:[#allocation6 + $0x30] sm:$0xff]
    %v119 = vld [vmem:[#allocation6 + $0x38] sm:$0xff]
    %v120 = vld [vmem:[#allocation6 + $0x40] sm:$0xff]
    %v121 = vld [vmem:[#allocation6 + $0x48] sm:$0xff]
    %v122 = vld [vmem:[#allocation6 + $0x50] sm:$0xff]
    %v123 = vld [vmem:[#allocation6 + $0x58] sm:$0xff]
    %v124 = vld [vmem:[#allocation6 + $0x60] sm:$0xff]
    %v125 = vld [vmem:[#allocation6 + $0x68] sm:$0xff]
    %v126 = vld [vmem:[#allocation6 + $0x70] sm:$0xff]
    %v127 = vld [vmem:[#allocation6 + $0x78] sm:$0xff]
    %v128 = vld [vmem:[#allocation6 + $0x80] sm:$0xff]
    %v129 = vld [vmem:[#allocation6 + $0x88] sm:$0xff]
    %v130 = vld [vmem:[#allocation6 + $0x90] sm:$0xff]
    %v131 = vld [vmem:[#allocation6 + $0x98] sm:$0xff]
    %v132 = vld [vmem:[#allocation6 + $0xa0] sm:$0xff]
    %v133 = vld [vmem:[#allocation6 + $0xa8] sm:$0xff]
    %v134 = vld [vmem:[#allocation6 + $0xb0] sm:$0xff]
    %v135 = vld [vmem:[#allocation6 + $0xb8] sm:$0xff]
    %v136 = vld [vmem:[#allocation6 + $0xc0] sm:$0xff]
    %v137 = vld [vmem:[#allocation6 + $0xc8] sm:$0xff]
    %v138 = vld [vmem:[#allocation6 + $0xd0] sm:$0xff]
    %v139 = vld [vmem:[#allocation6 + $0xd8] sm:$0xff]
    %v140 = vld [vmem:[#allocation6 + $0xe0] sm:$0xff]
    %v141 = vld [vmem:[#allocation6 + $0xe8] sm:$0xff]
    %v142 = vld [vmem:[#allocation6 + $0xf0] sm:$0xff]
    %v143 = vld [vmem:[#allocation6 + $0xf8] sm:$0xff]
    %v144 = vld [vmem:[#allocation6 + $0x100] sm:$0xff]
    %v145 = vld [vmem:[#allocation6 + $0x108] sm:$0xff]
    %v146 = vld [vmem:[#allocation6 + $0x110] sm:$0xff]
    %v147 = vld [vmem:[#allocation6 + $0x118] sm:$0xff]
    %v148 = vld [vmem:[#allocation6 + $0x120] sm:$0xff]
    %v149 = vld [vmem:[#allocation6 + $0x128] sm:$0xff]
    %v150 = vld [vmem:[#allocation6 + $0x130] sm:$0xff]
    %v151 = vld [vmem:[#allocation6 + $0x138] sm:$0xff]
    %v152 = vld [vmem:[#allocation6 + $0x140] sm:$0xff]
    %v153 = vld [vmem:[#allocation6 + $0x148] sm:$0xff]
    %v154 = vld [vmem:[#allocation6 + $0x150] sm:$0xff]
    %v155 = vld [vmem:[#allocation6 + $0x158] sm:$0xff]
    %v156 = vld [vmem:[#allocation6 + $0x160] sm:$0xff]
    %v157 = vld [vmem:[#allocation6 + $0x168] sm:$0xff]
    %v158 = vld [vmem:[#allocation6 + $0x170] sm:$0xff]
    %v159 = vld [vmem:[#allocation6 + $0x178] sm:$0xff]
    %v160 = vld [vmem:[#allocation6 + $0x180] sm:$0xff]
    %v161 = vld [vmem:[#allocation6 + $0x188] sm:$0xff]
    %v162 = vld [vmem:[#allocation6 + $0x190] sm:$0xff]
    %v163 = vld [vmem:[#allocation6 + $0x198] sm:$0xff]
    %v164 = vld [vmem:[#allocation6 + $0x1a0] sm:$0xff]
    %v165 = vld [vmem:[#allocation6 + $0x1a8] sm:$0xff]
    %v166 = vld [vmem:[#allocation6 + $0x1b0] sm:$0xff]
    %v167 = vld [vmem:[#allocation6 + $0x1b8] sm:$0xff]
    %v168 = vld [vmem:[#allocation6 + $0x1c0] sm:$0xff]
    %v169 = vld [vmem:[#allocation6 + $0x1c8] sm:$0xff]
    %v170 = vld [vmem:[#allocation6 + $0x1d0] sm:$0xff]
    %v171 = vld [vmem:[#allocation6 + $0x1d8] sm:$0xff]
    %v172 = vld [vmem:[#allocation6 + $0x1e0] sm:$0xff]
    %v173 = vld [vmem:[#allocation6 + $0x1e8] sm:$0xff]
    %v174 = vld [vmem:[#allocation6 + $0x1f0] sm:$0xff]
    %v175 = vld [vmem:[#allocation6 + $0x1f8] sm:$0xff]
    %v176 = vld [vmem:[#allocation6 + $0x200] sm:$0xff]
    %v177 = vld [vmem:[#allocation6 + $0x208] sm:$0xff]
    %v178 = vld [vmem:[#allocation6 + $0x210] sm:$0xff]
    %v179 = vld [vmem:[#allocation6 + $0x218] sm:$0xff]
    %v180 = vld [vmem:[#allocation6 + $0x220] sm:$0xff]
    %v181 = vld [vmem:[#allocation6 + $0x228] sm:$0xff]
    %v182 = vld [vmem:[#allocation6 + $0x230] sm:$0xff]
    %v183 = vld [vmem:[#allocation6 + $0x238] sm:$0xff]
    %v184 = vld [vmem:[#allocation6 + $0x240] sm:$0xff]
    %v185 = vld [vmem:[#allocation6 + $0x248] sm:$0xff]
    %v186 = vld [vmem:[#allocation6 + $0x250] sm:$0xff]
    %v187 = vld [vmem:[#allocation6 + $0x258] sm:$0xff]
    %v188 = vld [vmem:[#allocation6 + $0x260] sm:$0xff]
    %v189 = vld [vmem:[#allocation6 + $0x268] sm:$0xff]
    %v190 = vld [vmem:[#allocation6 + $0x270] sm:$0xff]
    %v191 = vld [vmem:[#allocation6 + $0x278] sm:$0xff]
    %v192 = vld [vmem:[#allocation6 + $0x280] sm:$0xff]
    %v193 = vld [vmem:[#allocation6 + $0x288] sm:$0xff]
    %v194 = vld [vmem:[#allocation6 + $0x290] sm:$0xff]
    %v195 = vld [vmem:[#allocation6 + $0x298] sm:$0xff]
    %v196 = vld [vmem:[#allocation6 + $0x2a0] sm:$0xff]
    %v197 = vld [vmem:[#allocation6 + $0x2a8] sm:$0xff]
    %v198 = vld [vmem:[#allocation6 + $0x2b0] sm:$0xff]
    %v199 = vld [vmem:[#allocation6 + $0x2b8] sm:$0xff]
    %v200 = vld [vmem:[#allocation6 + $0x2c0] sm:$0xff]
    %v201 = vld [vmem:[#allocation6 + $0x2c8] sm:$0xff]
    %v202 = vld [vmem:[#allocation6 + $0x2d0] sm:$0xff]
    %v203 = vld [vmem:[#allocation6 + $0x2d8] sm:$0xff]
    %v204 = vld [vmem:[#allocation6 + $0x2e0] sm:$0xff]
    %v205 = vld [vmem:[#allocation6 + $0x2e8] sm:$0xff]
    %v206 = vld [vmem:[#allocation6 + $0x2f0] sm:$0xff]
    %v207 = vld [vmem:[#allocation6 + $0x2f8] sm:$0xff]
    %v208 = vld [vmem:[#allocation6 + $0x300] sm:$0xff]
    %v209 = vld [vmem:[#allocation6 + $0x308] sm:$0xff]
    %v210 = vld [vmem:[#allocation6 + $0x310] sm:$0xff]
    %v211 = vld [vmem:[#allocation6 + $0x318] sm:$0xff]
    %v212 = vld [vmem:[#allocation6 + $0x320] sm:$0xff]
    %v213 = vld [vmem:[#allocation6 + $0x328] sm:$0xff]
    %v214 = vld [vmem:[#allocation6 + $0x330] sm:$0xff]
    %v215 = vld [vmem:[#allocation6 + $0x338] sm:$0xff]
    %v216 = vld [vmem:[#allocation6 + $0x340] sm:$0xff]
    %v217 = vld [vmem:[#allocation6 + $0x348] sm:$0xff]
    %v218 = vld [vmem:[#allocation6 + $0x350] sm:$0xff]
    %v219 = vld [vmem:[#allocation6 + $0x358] sm:$0xff]
    %v220 = vld [vmem:[#allocation6 + $0x360] sm:$0xff]
    %v221 = vld [vmem:[#allocation6 + $0x368] sm:$0xff]
    %v222 = vld [vmem:[#allocation6 + $0x370] sm:$0xff]
    %v223 = vld [vmem:[#allocation6 + $0x378] sm:$0xff]
    %v224 = vld [vmem:[#allocation6 + $0x380] sm:$0xff]
    %v225 = vld [vmem:[#allocation6 + $0x388] sm:$0xff]
    %v226 = vld [vmem:[#allocation6 + $0x390] sm:$0xff]
    %v227 = vld [vmem:[#allocation6 + $0x398] sm:$0xff]
    %v228 = vld [vmem:[#allocation6 + $0x3a0] sm:$0xff]
    %v229 = vld [vmem:[#allocation6 + $0x3a8] sm:$0xff]
    %v230 = vld [vmem:[#allocation6 + $0x3b0] sm:$0xff]
    %v231 = vld [vmem:[#allocation6 + $0x3b8] sm:$0xff]
    %v232 = vld [vmem:[#allocation6 + $0x3c0] sm:$0xff]
    %v233 = vld [vmem:[#allocation6 + $0x3c8] sm:$0xff]
    %v234 = vld [vmem:[#allocation6 + $0x3d0] sm:$0xff]
    %v235 = vld [vmem:[#allocation6 + $0x3d8] sm:$0xff]
    %v236 = vld [vmem:[#allocation6 + $0x3e0] sm:$0xff]
    %v237 = vld [vmem:[#allocation6 + $0x3e8] sm:$0xff]
    %v238 = vld [vmem:[#allocation6 + $0x3f0] sm:$0xff]
    %v239 = vld [vmem:[#allocation6 + $0x3f8] sm:$0xff]
    %v240 = vld [vmem:[#allocation6 + $0x400] sm:$0xff]
    %v241 = vld [vmem:[#allocation6 + $0x408] sm:$0xff]
    %v242 = vld [vmem:[#allocation6 + $0x410] sm:$0xff]
    %v243 = vld [vmem:[#allocation6 + $0x418] sm:$0xff]
    %v244 = vld [vmem:[#allocation6 + $0x420] sm:$0xff]
    %v245 = vld [vmem:[#allocation6 + $0x428] sm:$0xff]
    %v246 = vld [vmem:[#allocation6 + $0x430] sm:$0xff]
    %v247 = vld [vmem:[#allocation6 + $0x438] sm:$0xff]
    %v248 = vld [vmem:[#allocation6 + $0x440] sm:$0xff]
    %v249 = vld [vmem:[#allocation6 + $0x448] sm:$0xff]
    %v250 = vld [vmem:[#allocation6 + $0x450] sm:$0xff]
    %v251 = vld [vmem:[#allocation6 + $0x458] sm:$0xff]
    %v252 = vld [vmem:[#allocation6 + $0x460] sm:$0xff]
    %v253 = vld [vmem:[#allocation6 + $0x468] sm:$0xff]
    %v254 = vld [vmem:[#allocation6 + $0x470] sm:$0xff]
    %v255 = vld [vmem:[#allocation6 + $0x478] sm:$0xff]
    %v256 = vld [vmem:[#allocation6 + $0x480] sm:$0xff]
    %v257 = vld [vmem:[#allocation6 + $0x488] sm:$0xff]
    %v258 = vld [vmem:[#allocation6 + $0x490] sm:$0xff]
    %v259 = vld [vmem:[#allocation6 + $0x498] sm:$0xff]
    %v260 = vld [vmem:[#allocation6 + $0x4a0] sm:$0xff]
    %v261 = vld [vmem:[#allocation6 + $0x4a8] sm:$0xff]
    %v262 = vld [vmem:[#allocation6 + $0x4b0] sm:$0xff]
    %v263 = vld [vmem:[#allocation6 + $0x4b8] sm:$0xff]
    %v264 = vld [vmem:[#allocation6 + $0x4c0] sm:$0xff]
    %v265 = vld [vmem:[#allocation6 + $0x4c8] sm:$0xff]
    %v266 = vld [vmem:[#allocation6 + $0x4d0] sm:$0xff]
    %v267 = vld [vmem:[#allocation6 + $0x4d8] sm:$0xff]
    %v268 = vld [vmem:[#allocation6 + $0x4e0] sm:$0xff]
    %v269 = vld [vmem:[#allocation6 + $0x4e8] sm:$0xff]
    %v270 = vld [vmem:[#allocation6 + $0x4f0] sm:$0xff]
    %v271 = vld [vmem:[#allocation6 + $0x4f8] sm:$0xff]
    %v272 = vld [vmem:[#allocation6 + $0x500] sm:$0xff]
    %v273 = vld [vmem:[#allocation6 + $0x508] sm:$0xff]
    %v274 = vld [vmem:[#allocation6 + $0x510] sm:$0xff]
    %v275 = vld [vmem:[#allocation6 + $0x518] sm:$0xff]
    %v276 = vld [vmem:[#allocation6 + $0x520] sm:$0xff]
    %v277 = vld [vmem:[#allocation6 + $0x528] sm:$0xff]
    %v278 = vld [vmem:[#allocation6 + $0x530] sm:$0xff]
    %v279 = vld [vmem:[#allocation6 + $0x538] sm:$0xff]
    %v280 = vld [vmem:[#allocation6 + $0x540] sm:$0xff]
    %v281 = vld [vmem:[#allocation6 + $0x548] sm:$0xff]
    %v282 = vld [vmem:[#allocation6 + $0x550] sm:$0xff]
    %v283 = vld [vmem:[#allocation6 + $0x558] sm:$0xff]
    %v284 = vld [vmem:[#allocation6 + $0x560] sm:$0xff]
    %v285 = vld [vmem:[#allocation6 + $0x568] sm:$0xff]
    %v286 = vld [vmem:[#allocation6 + $0x570] sm:$0xff]
    %v287 = vld [vmem:[#allocation6 + $0x578] sm:$0xff]
    %v288 = vld [vmem:[#allocation6 + $0x580] sm:$0xff]
    %v289 = vld [vmem:[#allocation6 + $0x588] sm:$0xff]
    %v290 = vld [vmem:[#allocation6 + $0x590] sm:$0xff]
    %v291 = vld [vmem:[#allocation6 + $0x598] sm:$0xff]
    %v292 = vld [vmem:[#allocation6 + $0x5a0] sm:$0xff]
    %v293 = vld [vmem:[#allocation6 + $0x5a8] sm:$0xff]
    %v294 = vld [vmem:[#allocation6 + $0x5b0] sm:$0xff]
    %v295 = vld [vmem:[#allocation6 + $0x5b8] sm:$0xff]
    %v296 = vld [vmem:[#allocation6 + $0x5c0] sm:$0xff]
    %v297 = vld [vmem:[#allocation6 + $0x5c8] sm:$0xff]
    %v298 = vld [vmem:[#allocation6 + $0x5d0] sm:$0xff]
    %v299 = vld [vmem:[#allocation6 + $0x5d8] sm:$0xff]
    %v300 = vld [vmem:[#allocation6 + $0x5e0] sm:$0xff]
    %v301 = vld [vmem:[#allocation6 + $0x5e8] sm:$0xff]
    %v302 = vld [vmem:[#allocation6 + $0x5f0] sm:$0xff]
    %v303 = vld [vmem:[#allocation6 + $0x5f8] sm:$0xff]
    %v304 = vld [vmem:[#allocation6 + $0x600] sm:$0xff]
    %v305 = vld [vmem:[#allocation6 + $0x608] sm:$0xff]
    %v306 = vld [vmem:[#allocation6 + $0x610] sm:$0xff]
    %v307 = vld [vmem:[#allocation6 + $0x618] sm:$0xff]
    %v308 = vld [vmem:[%s2] sm:$0xf]
    %v310 = vlaneseq
    %v311 = vshrl.u32 %v310, 7
    %v312 = vsub.s32 0, %v311
    %v313 = vrot.slane %v308, %v312
    %v314 = vlaneseq
    %v315 = vshrl.u32 %v314, 7
    %v316 = vsub.s32 1, %v315
    %v317 = vrot.slane %v308, %v316
    %v318 = vlaneseq
    %v319 = vshrl.u32 %v318, 7
    %v320 = vsub.s32 2, %v319
    %v321 = vrot.slane %v308, %v320
    %v322 = vlaneseq
    %v323 = vshrl.u32 %v322, 7
    %v324 = vsub.s32 3, %v323
    %v325 = vrot.slane %v308, %v324
    %v526 = vunpack.c.l.b16 %v112
    %v527 = vunpack.c.h.b16 %v112
    %v528 = vunpack.c.l.b16 %v113
    %v529 = vunpack.c.h.b16 %v113
    %v530 = vunpack.c.l.b16 %v114
    %v531 = vunpack.c.h.b16 %v114
    %v532 = vunpack.c.l.b16 %v115
    %v533 = vunpack.c.h.b16 %v115
    %v534 = vunpack.c.l.b16 %v116
    %v535 = vunpack.c.h.b16 %v116
    %v536 = vunpack.c.l.b16 %v117
    %v537 = vunpack.c.h.b16 %v117
    %v538 = vunpack.c.l.b16 %v118
    %v539 = vunpack.c.h.b16 %v118
    %v540 = vunpack.c.l.b16 %v119
    %v541 = vunpack.c.h.b16 %v119
    %v542 = vunpack.c.l.b16 %v120
    %v543 = vunpack.c.h.b16 %v120
    %v544 = vunpack.c.l.b16 %v121
    %v545 = vunpack.c.h.b16 %v121
    %v546 = vunpack.c.l.b16 %v122
    %v547 = vunpack.c.h.b16 %v122
    %v548 = vunpack.c.l.b16 %v123
    %v549 = vunpack.c.h.b16 %v123
    %v550 = vunpack.c.l.b16 %v124
    %v551 = vunpack.c.h.b16 %v124
    %v552 = vunpack.c.l.b16 %v125
    %v553 = vunpack.c.h.b16 %v125
    %v554 = vunpack.c.l.b16 %v126
    %v555 = vunpack.c.h.b16 %v126
    %v556 = vunpack.c.l.b16 %v127
    %v557 = vunpack.c.h.b16 %v127
    %v558 = vunpack.c.l.b16 %v128
    %v559 = vunpack.c.h.b16 %v128
    %v560 = vunpack.c.l.b16 %v129
    %v561 = vunpack.c.h.b16 %v129
    %v562 = vunpack.c.l.b16 %v130
    %v563 = vunpack.c.h.b16 %v130
    %v564 = vunpack.c.l.b16 %v131
    %v565 = vunpack.c.h.b16 %v131
    %v566 = vunpack.c.l.b16 %v132
    %v567 = vunpack.c.h.b16 %v132
    %v568 = vunpack.c.l.b16 %v133
    %v569 = vunpack.c.h.b16 %v133
    %v570 = vunpack.c.l.b16 %v134
    %v571 = vunpack.c.h.b16 %v134
    %v572 = vunpack.c.l.b16 %v135
    %v573 = vunpack.c.h.b16 %v135
    %v574 = vunpack.c.l.b16 %v136
    %v575 = vunpack.c.h.b16 %v136
    %v576 = vunpack.c.l.b16 %v137
    %v577 = vunpack.c.h.b16 %v137
    %v578 = vunpack.c.l.b16 %v138
    %v579 = vunpack.c.h.b16 %v138
    %v580 = vunpack.c.l.b16 %v139
    %v581 = vunpack.c.h.b16 %v139
    %v582 = vunpack.c.l.b16 %v140
    %v583 = vunpack.c.h.b16 %v140
    %v584 = vunpack.c.l.b16 %v141
    %v585 = vunpack.c.h.b16 %v141
    %v586 = vunpack.c.l.b16 %v142
    %v587 = vunpack.c.h.b16 %v142
    %v588 = vunpack.c.l.b16 %v143
    %v589 = vunpack.c.h.b16 %v143
    %v590 = vunpack.c.l.b16 %v144
    %v591 = vunpack.c.h.b16 %v144
    %v592 = vunpack.c.l.b16 %v145
    %v593 = vunpack.c.h.b16 %v145
    %v594 = vunpack.c.l.b16 %v146
    %v595 = vunpack.c.h.b16 %v146
    %v596 = vunpack.c.l.b16 %v147
    %v597 = vunpack.c.h.b16 %v147
    %v598 = vunpack.c.l.b16 %v148
    %v599 = vunpack.c.h.b16 %v148
    %v600 = vunpack.c.l.b16 %v149
    %v601 = vunpack.c.h.b16 %v149
    %v602 = vunpack.c.l.b16 %v150
    %v603 = vunpack.c.h.b16 %v150
    %v604 = vunpack.c.l.b16 %v151
    %v605 = vunpack.c.h.b16 %v151
    %v606 = vunpack.c.l.b16 %v152
    %v607 = vunpack.c.h.b16 %v152
    %v608 = vunpack.c.l.b16 %v153
    %v609 = vunpack.c.h.b16 %v153
    %v610 = vunpack.c.l.b16 %v154
    %v611 = vunpack.c.h.b16 %v154
    %v612 = vunpack.c.l.b16 %v155
    %v613 = vunpack.c.h.b16 %v155
    %v614 = vunpack.c.l.b16 %v156
    %v615 = vunpack.c.h.b16 %v156
    %v616 = vunpack.c.l.b16 %v157
    %v617 = vunpack.c.h.b16 %v157
    %v618 = vunpack.c.l.b16 %v158
    %v619 = vunpack.c.h.b16 %v158
    %v620 = vunpack.c.l.b16 %v159
    %v621 = vunpack.c.h.b16 %v159
    %v622 = vunpack.c.l.b16 %v160
    %v623 = vunpack.c.h.b16 %v160
    %v624 = vunpack.c.l.b16 %v161
    %v625 = vunpack.c.h.b16 %v161
    %v626 = vunpack.c.l.b16 %v162
    %v627 = vunpack.c.h.b16 %v162
    %v628 = vunpack.c.l.b16 %v163
    %v629 = vunpack.c.h.b16 %v163
    %v630 = vunpack.c.l.b16 %v164
    %v631 = vunpack.c.h.b16 %v164
    %v632 = vunpack.c.l.b16 %v165
    %v633 = vunpack.c.h.b16 %v165
    %v634 = vunpack.c.l.b16 %v166
    %v635 = vunpack.c.h.b16 %v166
    %v636 = vunpack.c.l.b16 %v167
    %v637 = vunpack.c.h.b16 %v167
    %v638 = vunpack.c.l.b16 %v168
    %v639 = vunpack.c.h.b16 %v168
    %v640 = vunpack.c.l.b16 %v169
    %v641 = vunpack.c.h.b16 %v169
    %v642 = vunpack.c.l.b16 %v170
    %v643 = vunpack.c.h.b16 %v170
    %v644 = vunpack.c.l.b16 %v171
    %v645 = vunpack.c.h.b16 %v171
    %v646 = vunpack.c.l.b16 %v172
    %v647 = vunpack.c.h.b16 %v172
    %v648 = vunpack.c.l.b16 %v173
    %v649 = vunpack.c.h.b16 %v173
    %v650 = vunpack.c.l.b16 %v174
    %v651 = vunpack.c.h.b16 %v174
    %v652 = vunpack.c.l.b16 %v175
    %v653 = vunpack.c.h.b16 %v175
    %v654 = vunpack.c.l.b16 %v176
    %v655 = vunpack.c.h.b16 %v176
    %v656 = vunpack.c.l.b16 %v177
    %v657 = vunpack.c.h.b16 %v177
    %v658 = vunpack.c.l.b16 %v178
    %v659 = vunpack.c.h.b16 %v178
    %v660 = vunpack.c.l.b16 %v179
    %v661 = vunpack.c.h.b16 %v179
    %v662 = vunpack.c.l.b16 %v180
    %v663 = vunpack.c.h.b16 %v180
    %v664 = vunpack.c.l.b16 %v181
    %v665 = vunpack.c.h.b16 %v181
    %v666 = vunpack.c.l.b16 %v182
    %v667 = vunpack.c.h.b16 %v182
    %v668 = vunpack.c.l.b16 %v183
    %v669 = vunpack.c.h.b16 %v183
    %v670 = vunpack.c.l.b16 %v184
    %v671 = vunpack.c.h.b16 %v184
    %v672 = vunpack.c.l.b16 %v185
    %v673 = vunpack.c.h.b16 %v185
    %v674 = vunpack.c.l.b16 %v186
    %v675 = vunpack.c.h.b16 %v186
    %v676 = vunpack.c.l.b16 %v187
    %v677 = vunpack.c.h.b16 %v187
    %v678 = vunpack.c.l.b16 %v188
    %v679 = vunpack.c.h.b16 %v188
    %v680 = vunpack.c.l.b16 %v189
    %v681 = vunpack.c.h.b16 %v189
    %v682 = vunpack.c.l.b16 %v190
    %v683 = vunpack.c.h.b16 %v190
    %v684 = vunpack.c.l.b16 %v191
    %v685 = vunpack.c.h.b16 %v191
    %v686 = vunpack.c.l.b16 %v192
    %v687 = vunpack.c.h.b16 %v192
    %v688 = vunpack.c.l.b16 %v193
    %v689 = vunpack.c.h.b16 %v193
    %v690 = vunpack.c.l.b16 %v194
    %v691 = vunpack.c.h.b16 %v194
    %v692 = vunpack.c.l.b16 %v195
    %v693 = vunpack.c.h.b16 %v195
    %v694 = vunpack.c.l.b16 %v196
    %v695 = vunpack.c.h.b16 %v196
    %v696 = vunpack.c.l.b16 %v197
    %v697 = vunpack.c.h.b16 %v197
    %v698 = vunpack.c.l.b16 %v198
    %v699 = vunpack.c.h.b16 %v198
    %v700 = vunpack.c.l.b16 %v199
    %v701 = vunpack.c.h.b16 %v199
    %v702 = vunpack.c.l.b16 %v200
    %v703 = vunpack.c.h.b16 %v200
    %v704 = vunpack.c.l.b16 %v201
    %v705 = vunpack.c.h.b16 %v201
    %v706 = vunpack.c.l.b16 %v202
    %v707 = vunpack.c.h.b16 %v202
    %v708 = vunpack.c.l.b16 %v203
    %v709 = vunpack.c.h.b16 %v203
    %v710 = vunpack.c.l.b16 %v204
    %v711 = vunpack.c.h.b16 %v204
    %v712 = vunpack.c.l.b16 %v205
    %v713 = vunpack.c.h.b16 %v205
    %v714 = vunpack.c.l.b16 %v206
    %v715 = vunpack.c.h.b16 %v206
    %v716 = vunpack.c.l.b16 %v207
    %v717 = vunpack.c.h.b16 %v207
    %v718 = vunpack.c.l.b16 %v208
    %v719 = vunpack.c.h.b16 %v208
    %v720 = vunpack.c.l.b16 %v209
    %v721 = vunpack.c.h.b16 %v209
    %v722 = vunpack.c.l.b16 %v210
    %v723 = vunpack.c.h.b16 %v210
    %v724 = vunpack.c.l.b16 %v211
    %v725 = vunpack.c.h.b16 %v211
    %v726 = vunpack.c.l.b16 %v212
    %v727 = vunpack.c.h.b16 %v212
    %v728 = vunpack.c.l.b16 %v213
    %v729 = vunpack.c.h.b16 %v213
    %v730 = vunpack.c.l.b16 %v214
    %v731 = vunpack.c.h.b16 %v214
    %v732 = vunpack.c.l.b16 %v215
    %v733 = vunpack.c.h.b16 %v215
    %v734 = vunpack.c.l.b16 %v216
    %v735 = vunpack.c.h.b16 %v216
    %v736 = vunpack.c.l.b16 %v217
    %v737 = vunpack.c.h.b16 %v217
    %v738 = vunpack.c.l.b16 %v218
    %v739 = vunpack.c.h.b16 %v218
    %v740 = vunpack.c.l.b16 %v219
    %v741 = vunpack.c.h.b16 %v219
    %v742 = vunpack.c.l.b16 %v220
    %v743 = vunpack.c.h.b16 %v220
    %v744 = vunpack.c.l.b16 %v221
    %v745 = vunpack.c.h.b16 %v221
    %v746 = vunpack.c.l.b16 %v222
    %v747 = vunpack.c.h.b16 %v222
    %v748 = vunpack.c.l.b16 %v223
    %v749 = vunpack.c.h.b16 %v223
    %v750 = vunpack.c.l.b16 %v224
    %v751 = vunpack.c.h.b16 %v224
    %v752 = vunpack.c.l.b16 %v225
    %v753 = vunpack.c.h.b16 %v225
    %v754 = vunpack.c.l.b16 %v226
    %v755 = vunpack.c.h.b16 %v226
    %v756 = vunpack.c.l.b16 %v227
    %v757 = vunpack.c.h.b16 %v227
    %v758 = vunpack.c.l.b16 %v228
    %v759 = vunpack.c.h.b16 %v228
    %v760 = vunpack.c.l.b16 %v229
    %v761 = vunpack.c.h.b16 %v229
    %v762 = vunpack.c.l.b16 %v230
    %v763 = vunpack.c.h.b16 %v230
    %v764 = vunpack.c.l.b16 %v231
    %v765 = vunpack.c.h.b16 %v231
    %v766 = vunpack.c.l.b16 %v232
    %v767 = vunpack.c.h.b16 %v232
    %v768 = vunpack.c.l.b16 %v233
    %v769 = vunpack.c.h.b16 %v233
    %v770 = vunpack.c.l.b16 %v234
    %v771 = vunpack.c.h.b16 %v234
    %v772 = vunpack.c.l.b16 %v235
    %v773 = vunpack.c.h.b16 %v235
    %v774 = vunpack.c.l.b16 %v236
    %v775 = vunpack.c.h.b16 %v236
    %v776 = vunpack.c.l.b16 %v237
    %v777 = vunpack.c.h.b16 %v237
    %v778 = vunpack.c.l.b16 %v238
    %v779 = vunpack.c.h.b16 %v238
    %v780 = vunpack.c.l.b16 %v239
    %v781 = vunpack.c.h.b16 %v239
    %v782 = vunpack.c.l.b16 %v240
    %v783 = vunpack.c.h.b16 %v240
    %v784 = vunpack.c.l.b16 %v241
    %v785 = vunpack.c.h.b16 %v241
    %v786 = vunpack.c.l.b16 %v242
    %v787 = vunpack.c.h.b16 %v242
    %v788 = vunpack.c.l.b16 %v243
    %v789 = vunpack.c.h.b16 %v243
    %v790 = vunpack.c.l.b16 %v244
    %v791 = vunpack.c.h.b16 %v244
    %v792 = vunpack.c.l.b16 %v245
    %v793 = vunpack.c.h.b16 %v245
    %v794 = vunpack.c.l.b16 %v246
    %v795 = vunpack.c.h.b16 %v246
    %v796 = vunpack.c.l.b16 %v247
    %v797 = vunpack.c.h.b16 %v247
    %v798 = vunpack.c.l.b16 %v248
    %v799 = vunpack.c.h.b16 %v248
    %v800 = vunpack.c.l.b16 %v249
    %v801 = vunpack.c.h.b16 %v249
    %v802 = vunpack.c.l.b16 %v250
    %v803 = vunpack.c.h.b16 %v250
    %v804 = vunpack.c.l.b16 %v251
    %v805 = vunpack.c.h.b16 %v251
    %v806 = vunpack.c.l.b16 %v252
    %v807 = vunpack.c.h.b16 %v252
    %v808 = vunpack.c.l.b16 %v253
    %v809 = vunpack.c.h.b16 %v253
    %v810 = vunpack.c.l.b16 %v254
    %v811 = vunpack.c.h.b16 %v254
    %v812 = vunpack.c.l.b16 %v255
    %v813 = vunpack.c.h.b16 %v255
    %v814 = vunpack.c.l.b16 %v256
    %v815 = vunpack.c.h.b16 %v256
    %v816 = vunpack.c.l.b16 %v257
    %v817 = vunpack.c.h.b16 %v257
    %v818 = vunpack.c.l.b16 %v258
    %v819 = vunpack.c.h.b16 %v258
    %v820 = vunpack.c.l.b16 %v259
    %v821 = vunpack.c.h.b16 %v259
    %v822 = vunpack.c.l.b16 %v260
    %v823 = vunpack.c.h.b16 %v260
    %v824 = vunpack.c.l.b16 %v261
    %v825 = vunpack.c.h.b16 %v261
    %v826 = vunpack.c.l.b16 %v262
    %v827 = vunpack.c.h.b16 %v262
    %v828 = vunpack.c.l.b16 %v263
    %v829 = vunpack.c.h.b16 %v263
    %v830 = vunpack.c.l.b16 %v264
    %v831 = vunpack.c.h.b16 %v264
    %v832 = vunpack.c.l.b16 %v265
    %v833 = vunpack.c.h.b16 %v265
    %v834 = vunpack.c.l.b16 %v266
    %v835 = vunpack.c.h.b16 %v266
    %v836 = vunpack.c.l.b16 %v267
    %v837 = vunpack.c.h.b16 %v267
    %v838 = vunpack.c.l.b16 %v268
    %v839 = vunpack.c.h.b16 %v268
    %v840 = vunpack.c.l.b16 %v269
    %v841 = vunpack.c.h.b16 %v269
    %v842 = vunpack.c.l.b16 %v270
    %v843 = vunpack.c.h.b16 %v270
    %v844 = vunpack.c.l.b16 %v271
    %v845 = vunpack.c.h.b16 %v271
    %v846 = vunpack.c.l.b16 %v272
    %v847 = vunpack.c.h.b16 %v272
    %v848 = vunpack.c.l.b16 %v273
    %v849 = vunpack.c.h.b16 %v273
    %v850 = vunpack.c.l.b16 %v274
    %v851 = vunpack.c.h.b16 %v274
    %v852 = vunpack.c.l.b16 %v275
    %v853 = vunpack.c.h.b16 %v275
    %v854 = vunpack.c.l.b16 %v276
    %v855 = vunpack.c.h.b16 %v276
    %v856 = vunpack.c.l.b16 %v277
    %v857 = vunpack.c.h.b16 %v277
    %v858 = vunpack.c.l.b16 %v278
    %v859 = vunpack.c.h.b16 %v278
    %v860 = vunpack.c.l.b16 %v279
    %v861 = vunpack.c.h.b16 %v279
    %v862 = vunpack.c.l.b16 %v280
    %v863 = vunpack.c.h.b16 %v280
    %v864 = vunpack.c.l.b16 %v281
    %v865 = vunpack.c.h.b16 %v281
    %v866 = vunpack.c.l.b16 %v282
    %v867 = vunpack.c.h.b16 %v282
    %v868 = vunpack.c.l.b16 %v283
    %v869 = vunpack.c.h.b16 %v283
    %v870 = vunpack.c.l.b16 %v284
    %v871 = vunpack.c.h.b16 %v284
    %v872 = vunpack.c.l.b16 %v285
    %v873 = vunpack.c.h.b16 %v285
    %v874 = vunpack.c.l.b16 %v286
    %v875 = vunpack.c.h.b16 %v286
    %v876 = vunpack.c.l.b16 %v287
    %v877 = vunpack.c.h.b16 %v287
    %v878 = vunpack.c.l.b16 %v288
    %v879 = vunpack.c.h.b16 %v288
    %v880 = vunpack.c.l.b16 %v289
    %v881 = vunpack.c.h.b16 %v289
    %v882 = vunpack.c.l.b16 %v290
    %v883 = vunpack.c.h.b16 %v290
    %v884 = vunpack.c.l.b16 %v291
    %v885 = vunpack.c.h.b16 %v291
    %v886 = vunpack.c.l.b16 %v292
    %v887 = vunpack.c.h.b16 %v292
    %v888 = vunpack.c.l.b16 %v293
    %v889 = vunpack.c.h.b16 %v293
    %v890 = vunpack.c.l.b16 %v294
    %v891 = vunpack.c.h.b16 %v294
    %v892 = vunpack.c.l.b16 %v295
    %v893 = vunpack.c.h.b16 %v295
    %v894 = vunpack.c.l.b16 %v296
    %v895 = vunpack.c.h.b16 %v296
    %v896 = vunpack.c.l.b16 %v297
    %v897 = vunpack.c.h.b16 %v297
    %v898 = vunpack.c.l.b16 %v298
    %v899 = vunpack.c.h.b16 %v298
    %v900 = vunpack.c.l.b16 %v299
    %v901 = vunpack.c.h.b16 %v299
    %v902 = vunpack.c.l.b16 %v300
    %v903 = vunpack.c.h.b16 %v300
    %v904 = vunpack.c.l.b16 %v301
    %v905 = vunpack.c.h.b16 %v301
    %v906 = vunpack.c.l.b16 %v302
    %v907 = vunpack.c.h.b16 %v302
    %v908 = vunpack.c.l.b16 %v303
    %v909 = vunpack.c.h.b16 %v303
    %v910 = vunpack.c.l.b16 %v304
    %v911 = vunpack.c.h.b16 %v304
    %v912 = vunpack.c.l.b16 %v305
    %v913 = vunpack.c.h.b16 %v305
    %v914 = vunpack.c.l.b16 %v306
    %v915 = vunpack.c.h.b16 %v306
    %v916 = vunpack.c.l.b16 %v307
    %v917 = vunpack.c.h.b16 %v307
    %v918 = vpack.c.b16 %v530, %v526
    %v919 = vpack.c.b16 %v531, %v527
    %v920 = vpack.c.b16 %v532, %v528
    %v921 = vpack.c.b16 %v533, %v529
    %v922 = vpack.c.b16 %v538, %v534
    %v923 = vpack.c.b16 %v539, %v535
    %v924 = vpack.c.b16 %v540, %v536
    %v925 = vpack.c.b16 %v541, %v537
    %v926 = vpack.c.b16 %v546, %v542
    %v927 = vpack.c.b16 %v547, %v543
    %v928 = vpack.c.b16 %v548, %v544
    %v929 = vpack.c.b16 %v549, %v545
    %v930 = vpack.c.b16 %v554, %v550
    %v931 = vpack.c.b16 %v555, %v551
    %v932 = vpack.c.b16 %v556, %v552
    %v933 = vpack.c.b16 %v557, %v553
    %v934 = vpack.c.b16 %v562, %v558
    %v935 = vpack.c.b16 %v563, %v559
    %v936 = vpack.c.b16 %v564, %v560
    %v937 = vpack.c.b16 %v565, %v561
    %v938 = vpack.c.b16 %v570, %v566
    %v939 = vpack.c.b16 %v571, %v567
    %v940 = vpack.c.b16 %v572, %v568
    %v941 = vpack.c.b16 %v573, %v569
    %v942 = vpack.c.b16 %v578, %v574
    %v943 = vpack.c.b16 %v579, %v575
    %v944 = vpack.c.b16 %v580, %v576
    %v945 = vpack.c.b16 %v581, %v577
    %v946 = vpack.c.b16 %v586, %v582
    %v947 = vpack.c.b16 %v587, %v583
    %v948 = vpack.c.b16 %v588, %v584
    %v949 = vpack.c.b16 %v589, %v585
    %v950 = vpack.c.b16 %v594, %v590
    %v951 = vpack.c.b16 %v595, %v591
    %v952 = vpack.c.b16 %v596, %v592
    %v953 = vpack.c.b16 %v597, %v593
    %v954 = vpack.c.b16 %v602, %v598
    %v955 = vpack.c.b16 %v603, %v599
    %v956 = vpack.c.b16 %v604, %v600
    %v957 = vpack.c.b16 %v605, %v601
    %v958 = vpack.c.b16 %v610, %v606
    %v959 = vpack.c.b16 %v611, %v607
    %v960 = vpack.c.b16 %v612, %v608
    %v961 = vpack.c.b16 %v613, %v609
    %v962 = vpack.c.b16 %v618, %v614
    %v963 = vpack.c.b16 %v619, %v615
    %v964 = vpack.c.b16 %v620, %v616
    %v965 = vpack.c.b16 %v621, %v617
    %v966 = vpack.c.b16 %v626, %v622
    %v967 = vpack.c.b16 %v627, %v623
    %v968 = vpack.c.b16 %v628, %v624
    %v969 = vpack.c.b16 %v629, %v625
    %v970 = vpack.c.b16 %v634, %v630
    %v971 = vpack.c.b16 %v635, %v631
    %v972 = vpack.c.b16 %v636, %v632
    %v973 = vpack.c.b16 %v637, %v633
    %v974 = vpack.c.b16 %v642, %v638
    %v975 = vpack.c.b16 %v643, %v639
    %v976 = vpack.c.b16 %v644, %v640
    %v977 = vpack.c.b16 %v645, %v641
    %v978 = vpack.c.b16 %v650, %v646
    %v979 = vpack.c.b16 %v651, %v647
    %v980 = vpack.c.b16 %v652, %v648
    %v981 = vpack.c.b16 %v653, %v649
    %v982 = vpack.c.b16 %v658, %v654
    %v983 = vpack.c.b16 %v659, %v655
    %v984 = vpack.c.b16 %v660, %v656
    %v985 = vpack.c.b16 %v661, %v657
    %v986 = vpack.c.b16 %v666, %v662
    %v987 = vpack.c.b16 %v667, %v663
    %v988 = vpack.c.b16 %v668, %v664
    %v989 = vpack.c.b16 %v669, %v665
    %v990 = vpack.c.b16 %v674, %v670
    %v991 = vpack.c.b16 %v675, %v671
    %v992 = vpack.c.b16 %v676, %v672
    %v993 = vpack.c.b16 %v677, %v673
    %v994 = vpack.c.b16 %v682, %v678
    %v995 = vpack.c.b16 %v683, %v679
    %v996 = vpack.c.b16 %v684, %v680
    %v997 = vpack.c.b16 %v685, %v681
    %v998 = vpack.c.b16 %v690, %v686
    %v999 = vpack.c.b16 %v691, %v687
    %v1000 = vpack.c.b16 %v692, %v688
    %v1001 = vpack.c.b16 %v693, %v689
    %v1002 = vpack.c.b16 %v698, %v694
    %v1003 = vpack.c.b16 %v699, %v695
    %v1004 = vpack.c.b16 %v700, %v696
    %v1005 = vpack.c.b16 %v701, %v697
    %v1006 = vpack.c.b16 %v706, %v702
    %v1007 = vpack.c.b16 %v707, %v703
    %v1008 = vpack.c.b16 %v708, %v704
    %v1009 = vpack.c.b16 %v709, %v705
    %v1010 = vpack.c.b16 %v714, %v710
    %v1011 = vpack.c.b16 %v715, %v711
    %v1012 = vpack.c.b16 %v716, %v712
    %v1013 = vpack.c.b16 %v717, %v713
    %v1014 = vpack.c.b16 %v722, %v718
    %v1015 = vpack.c.b16 %v723, %v719
    %v1016 = vpack.c.b16 %v724, %v720
    %v1017 = vpack.c.b16 %v725, %v721
    %v1018 = vpack.c.b16 %v730, %v726
    %v1019 = vpack.c.b16 %v731, %v727
    %v1020 = vpack.c.b16 %v732, %v728
    %v1021 = vpack.c.b16 %v733, %v729
    %v1022 = vpack.c.b16 %v738, %v734
    %v1023 = vpack.c.b16 %v739, %v735
    %v1024 = vpack.c.b16 %v740, %v736
    %v1025 = vpack.c.b16 %v741, %v737
    %v1026 = vpack.c.b16 %v746, %v742
    %v1027 = vpack.c.b16 %v747, %v743
    %v1028 = vpack.c.b16 %v748, %v744
    %v1029 = vpack.c.b16 %v749, %v745
    %v1030 = vpack.c.b16 %v754, %v750
    %v1031 = vpack.c.b16 %v755, %v751
    %v1032 = vpack.c.b16 %v756, %v752
    %v1033 = vpack.c.b16 %v757, %v753
    %v1034 = vpack.c.b16 %v762, %v758
    %v1035 = vpack.c.b16 %v763, %v759
    %v1036 = vpack.c.b16 %v764, %v760
    %v1037 = vpack.c.b16 %v765, %v761
    %v1038 = vpack.c.b16 %v770, %v766
    %v1039 = vpack.c.b16 %v771, %v767
    %v1040 = vpack.c.b16 %v772, %v768
    %v1041 = vpack.c.b16 %v773, %v769
    %v1042 = vpack.c.b16 %v778, %v774
    %v1043 = vpack.c.b16 %v779, %v775
    %v1044 = vpack.c.b16 %v780, %v776
    %v1045 = vpack.c.b16 %v781, %v777
    %v1046 = vpack.c.b16 %v786, %v782
    %v1047 = vpack.c.b16 %v787, %v783
    %v1048 = vpack.c.b16 %v788, %v784
    %v1049 = vpack.c.b16 %v789, %v785
    %v1050 = vpack.c.b16 %v794, %v790
    %v1051 = vpack.c.b16 %v795, %v791
    %v1052 = vpack.c.b16 %v796, %v792
    %v1053 = vpack.c.b16 %v797, %v793
    %v1054 = vpack.c.b16 %v802, %v798
    %v1055 = vpack.c.b16 %v803, %v799
    %v1056 = vpack.c.b16 %v804, %v800
    %v1057 = vpack.c.b16 %v805, %v801
    %v1058 = vpack.c.b16 %v810, %v806
    %v1059 = vpack.c.b16 %v811, %v807
    %v1060 = vpack.c.b16 %v812, %v808
    %v1061 = vpack.c.b16 %v813, %v809
    %v1062 = vpack.c.b16 %v818, %v814
    %v1063 = vpack.c.b16 %v819, %v815
    %v1064 = vpack.c.b16 %v820, %v816
    %v1065 = vpack.c.b16 %v821, %v817
    %v1066 = vpack.c.b16 %v826, %v822
    %v1067 = vpack.c.b16 %v827, %v823
    %v1068 = vpack.c.b16 %v828, %v824
    %v1069 = vpack.c.b16 %v829, %v825
    %v1070 = vpack.c.b16 %v834, %v830
    %v1071 = vpack.c.b16 %v835, %v831
    %v1072 = vpack.c.b16 %v836, %v832
    %v1073 = vpack.c.b16 %v837, %v833
    %v1074 = vpack.c.b16 %v842, %v838
    %v1075 = vpack.c.b16 %v843, %v839
    %v1076 = vpack.c.b16 %v844, %v840
    %v1077 = vpack.c.b16 %v845, %v841
    %v1078 = vpack.c.b16 %v850, %v846
    %v1079 = vpack.c.b16 %v851, %v847
    %v1080 = vpack.c.b16 %v852, %v848
    %v1081 = vpack.c.b16 %v853, %v849
    %v1082 = vpack.c.b16 %v858, %v854
    %v1083 = vpack.c.b16 %v859, %v855
    %v1084 = vpack.c.b16 %v860, %v856
    %v1085 = vpack.c.b16 %v861, %v857
    %v1086 = vpack.c.b16 %v866, %v862
    %v1087 = vpack.c.b16 %v867, %v863
    %v1088 = vpack.c.b16 %v868, %v864
    %v1089 = vpack.c.b16 %v869, %v865
    %v1090 = vpack.c.b16 %v874, %v870
    %v1091 = vpack.c.b16 %v875, %v871
    %v1092 = vpack.c.b16 %v876, %v872
    %v1093 = vpack.c.b16 %v877, %v873
    %v1094 = vpack.c.b16 %v882, %v878
    %v1095 = vpack.c.b16 %v883, %v879
    %v1096 = vpack.c.b16 %v884, %v880
    %v1097 = vpack.c.b16 %v885, %v881
    %v1098 = vpack.c.b16 %v890, %v886
    %v1099 = vpack.c.b16 %v891, %v887
    %v1100 = vpack.c.b16 %v892, %v888
    %v1101 = vpack.c.b16 %v893, %v889
    %v1102 = vpack.c.b16 %v898, %v894
    %v1103 = vpack.c.b16 %v899, %v895
    %v1104 = vpack.c.b16 %v900, %v896
    %v1105 = vpack.c.b16 %v901, %v897
    %v1106 = vpack.c.b16 %v906, %v902
    %v1107 = vpack.c.b16 %v907, %v903
    %v1108 = vpack.c.b16 %v908, %v904
    %v1109 = vpack.c.b16 %v909, %v905
    %v1110 = vpack.c.b16 %v914, %v910
    %v1111 = vpack.c.b16 %v915, %v911
    %v1112 = vpack.c.b16 %v916, %v912
    %v1113 = vpack.c.b16 %v917, %v913
    %vm1310 = vcmask 130048
    %v1312 = vsel %vm1310, %v111, 0
    %1314 = vmatprep.subr.bf16.mxu0 %v947
    %1315 = vmatpush1.bf16.msra.mxu0 %v946
    %1316 = vmatprep.subr.bf16.mxu0 %v943
    %1317 = vmatpush1.bf16.msra.mxu0 %v942
    %1318 = vmatprep.subr.bf16.mxu0 %v939
    %1319 = vmatpush1.bf16.msra.mxu0 %v938
    %1320 = vmatprep.subr.bf16.mxu0 %v935
    %1321 = vmatpush1.bf16.msra.mxu0 %v934
    %1322 = vmatprep.subr.bf16.mxu0 %v931
    %1323 = vmatpush1.bf16.msra.mxu0 %v930
    %1324 = vmatprep.subr.bf16.mxu0 %v927
    %1325 = vmatpush1.bf16.msra.mxu0 %v926
    %1326 = vmatprep.subr.bf16.mxu0 %v923
    %1327 = vmatpush1.bf16.msra.mxu0 %v922
    %1328 = vmatprep.subr.bf16.mxu0 %v919
    %1329 = vmatpush1.bf16.msra.mxu0 %v918
    %1330 = vmatprep.subr.bf16.mxu0 %v979
    %1331 = vmatpush2.bf16.msra.mxu0 %v978
    %1332 = vmatprep.subr.bf16.mxu0 %v975
    %1333 = vmatpush2.bf16.msra.mxu0 %v974
    %1334 = vmatprep.subr.bf16.mxu0 %v971
    %1335 = vmatpush2.bf16.msra.mxu0 %v970
    %1336 = vmatprep.subr.bf16.mxu0 %v967
    %1337 = vmatpush2.bf16.msra.mxu0 %v966
    %1338 = vmatprep.subr.bf16.mxu0 %v963
    %1339 = vmatpush2.bf16.msra.mxu0 %v962
    %1340 = vmatprep.subr.bf16.mxu0 %v959
    %1341 = vmatpush2.bf16.msra.mxu0 %v958
    %1342 = vmatprep.subr.bf16.mxu0 %v955
    %1343 = vmatpush2.bf16.msra.mxu0 %v954
    %1344 = vmatprep.subr.bf16.mxu0 %v951
    %1345 = vmatpush2.bf16.msra.mxu0 %v950
    %1346 = vmatprep.mubr.bf16.mxu0 %v106
    %1347 = vmatmul.mubr.bf16.gmra.mxu0 %v105
    %v1348 = vpop.f32.mrf.mxu0
    %v1349 = vadd.f32 %v313, %v1348
    %v1350 = vpop.f32.mrf.mxu0
    %v1351 = vadd.f32 %v317, %v1350
    %v1352 = vpop.f32.mrf.mxu0
    %v1353 = vadd.f32 %v313, %v1352
    %v1354 = vpop.f32.mrf.mxu0
    %v1355 = vadd.f32 %v317, %v1354
    %1356 = vdwg.mxu0
    %1357 = vmatprep.subr.bf16.mxu0 %v1011
    %1358 = vmatpush1.bf16.msra.mxu0 %v1010
    %1359 = vmatprep.subr.bf16.mxu0 %v1007
    %1360 = vmatpush1.bf16.msra.mxu0 %v1006
    %1361 = vmatprep.subr.bf16.mxu0 %v1003
    %1362 = vmatpush1.bf16.msra.mxu0 %v1002
    %1363 = vmatprep.subr.bf16.mxu0 %v999
    %1364 = vmatpush1.bf16.msra.mxu0 %v998
    %1365 = vmatprep.subr.bf16.mxu0 %v995
    %1366 = vmatpush1.bf16.msra.mxu0 %v994
    %1367 = vmatprep.subr.bf16.mxu0 %v991
    %1368 = vmatpush1.bf16.msra.mxu0 %v990
    %1369 = vmatprep.subr.bf16.mxu0 %v987
    %1370 = vmatpush1.bf16.msra.mxu0 %v986
    %1371 = vmatprep.subr.bf16.mxu0 %v983
    %1372 = vmatpush1.bf16.msra.mxu0 %v982
    %1373 = vmatprep.subr.bf16.mxu0 %v1043
    %1374 = vmatpush2.bf16.msra.mxu0 %v1042
    %1375 = vmatprep.subr.bf16.mxu0 %v1039
    %1376 = vmatpush2.bf16.msra.mxu0 %v1038
    %1377 = vmatprep.subr.bf16.mxu0 %v1035
    %1378 = vmatpush2.bf16.msra.mxu0 %v1034
    %1379 = vmatprep.subr.bf16.mxu0 %v1031
    %1380 = vmatpush2.bf16.msra.mxu0 %v1030
    %1381 = vmatprep.subr.bf16.mxu0 %v1027
    %1382 = vmatpush2.bf16.msra.mxu0 %v1026
    %1383 = vmatprep.subr.bf16.mxu0 %v1023
    %1384 = vmatpush2.bf16.msra.mxu0 %v1022
    %1385 = vmatprep.subr.bf16.mxu0 %v1019
    %1386 = vmatpush2.bf16.msra.mxu0 %v1018
    %1387 = vmatprep.subr.bf16.mxu0 %v1015
    %1388 = vmatpush2.bf16.msra.mxu0 %v1014
    %1389 = vmatprep.mubr.bf16.mxu0 %v108
    %1390 = vmatmul.mubr.bf16.gmra.mxu0 %v107
    %v1391 = vpop.f32.mrf.mxu0
    %v1392 = vadd.f32 %v1349, %v1391
    %v1393 = vpop.f32.mrf.mxu0
    %v1394 = vadd.f32 %v1351, %v1393
    %v1395 = vpop.f32.mrf.mxu0
    %v1396 = vadd.f32 %v1353, %v1395
    %v1397 = vpop.f32.mrf.mxu0
    %v1398 = vadd.f32 %v1355, %v1397
    %1399 = vdwg.mxu0
    %1400 = vmatprep.subr.bf16.mxu0 %v1075
    %1401 = vmatpush1.bf16.msra.mxu0 %v1074
    %1402 = vmatprep.subr.bf16.mxu0 %v1071
    %1403 = vmatpush1.bf16.msra.mxu0 %v1070
    %1404 = vmatprep.subr.bf16.mxu0 %v1067
    %1405 = vmatpush1.bf16.msra.mxu0 %v1066
    %1406 = vmatprep.subr.bf16.mxu0 %v1063
    %1407 = vmatpush1.bf16.msra.mxu0 %v1062
    %1408 = vmatprep.subr.bf16.mxu0 %v1059
    %1409 = vmatpush1.bf16.msra.mxu0 %v1058
    %1410 = vmatprep.subr.bf16.mxu0 %v1055
    %1411 = vmatpush1.bf16.msra.mxu0 %v1054
    %1412 = vmatprep.subr.bf16.mxu0 %v1051
    %1413 = vmatpush1.bf16.msra.mxu0 %v1050
    %1414 = vmatprep.subr.bf16.mxu0 %v1047
    %1415 = vmatpush1.bf16.msra.mxu0 %v1046
    %1416 = vmatprep.subr.bf16.mxu0 %v1107
    %1417 = vmatpush2.bf16.msra.mxu0 %v1106
    %1418 = vmatprep.subr.bf16.mxu0 %v1103
    %1419 = vmatpush2.bf16.msra.mxu0 %v1102
    %1420 = vmatprep.subr.bf16.mxu0 %v1099
    %1421 = vmatpush2.bf16.msra.mxu0 %v1098
    %1422 = vmatprep.subr.bf16.mxu0 %v1095
    %1423 = vmatpush2.bf16.msra.mxu0 %v1094
    %1424 = vmatprep.subr.bf16.mxu0 %v1091
    %1425 = vmatpush2.bf16.msra.mxu0 %v1090
    %1426 = vmatprep.subr.bf16.mxu0 %v1087
    %1427 = vmatpush2.bf16.msra.mxu0 %v1086
    %1428 = vmatprep.subr.bf16.mxu0 %v1083
    %1429 = vmatpush2.bf16.msra.mxu0 %v1082
    %1430 = vmatprep.subr.bf16.mxu0 %v1079
    %1431 = vmatpush2.bf16.msra.mxu0 %v1078
    %1432 = vmatprep.mubr.bf16.mxu0 %v110
    %1433 = vmatmul.mubr.bf16.gmra.mxu0 %v109
    %v1434 = vpop.f32.mrf.mxu0
    %v1435 = vadd.f32 %v1392, %v1434
    %v1436 = vpop.f32.mrf.mxu0
    %v1437 = vadd.f32 %v1394, %v1436
    %v1438 = vpop.f32.mrf.mxu0
    %v1439 = vadd.f32 %v1396, %v1438
    %v1440 = vpop.f32.mrf.mxu0
    %v1441 = vadd.f32 %v1398, %v1440
    %1442 = vdwg.mxu0
    %1443 = vmatprep.subr.bf16.mxu0 0
    %1444 = vmatpush1.bf16.msra.mxu0 0
    %1445 = vmatprep.subr.bf16.mxu0 0
    %1446 = vmatpush1.bf16.msra.mxu0 0
    %1447 = vmatprep.subr.bf16.mxu0 0
    %1448 = vmatpush1.bf16.msra.mxu0 0
    %1449 = vmatprep.subr.bf16.mxu0 0
    %1450 = vmatpush1.bf16.msra.mxu0 0
    %1451 = vmatprep.subr.bf16.mxu0 0
    %1452 = vmatpush1.bf16.msra.mxu0 0
    %1453 = vmatprep.subr.bf16.mxu0 0
    %1454 = vmatpush1.bf16.msra.mxu0 0
    %1455 = vmatprep.subr.bf16.mxu0 0
    %1456 = vmatpush1.bf16.msra.mxu0 0
    %1457 = vmatprep.subr.bf16.mxu0 %v1111
    %1458 = vmatpush1.bf16.msra.mxu0 %v1110
    %1459 = vmatprep.subr.bf16.mxu0 0
    %1460 = vmatpush2.bf16.msra.mxu0 0
    %1461 = vmatprep.subr.bf16.mxu0 0
    %1462 = vmatpush2.bf16.msra.mxu0 0
    %1463 = vmatprep.subr.bf16.mxu0 0
    %1464 = vmatpush2.bf16.msra.mxu0 0
    %1465 = vmatprep.subr.bf16.mxu0 0
    %1466 = vmatpush2.bf16.msra.mxu0 0
    %1467 = vmatprep.subr.bf16.mxu0 0
    %1468 = vmatpush2.bf16.msra.mxu0 0
    %1469 = vmatprep.subr.bf16.mxu0 0
    %1470 = vmatpush2.bf16.msra.mxu0 0
    %1471 = vmatprep.subr.bf16.mxu0 0
    %1472 = vmatpush2.bf16.msra.mxu0 0
    %1473 = vmatprep.subr.bf16.mxu0 0
    %1474 = vmatpush2.bf16.msra.mxu0 0
    %1475 = vmatprep.mubr.bf16.mxu0 0
    %1476 = vmatmul.mubr.bf16.gmra.mxu0 %v1312
    %v1477 = vpop.f32.mrf.mxu0
    %v1478 = vadd.f32 %v1435, %v1477
    %v1479 = vpop.f32.mrf.mxu0
    %v1480 = vadd.f32 %v1437, %v1479
    %v1481 = vpop.f32.mrf.mxu0
    %v1482 = vadd.f32 %v1439, %v1481
    %v1483 = vpop.f32.mrf.mxu0
    %v1484 = vadd.f32 %v1441, %v1483
    %1485 = vdwg.mxu0
    %1486 = vmatprep.subr.bf16.mxu0 %v949
    %1487 = vmatpush1.bf16.msra.mxu0 %v948
    %1488 = vmatprep.subr.bf16.mxu0 %v945
    %1489 = vmatpush1.bf16.msra.mxu0 %v944
    %1490 = vmatprep.subr.bf16.mxu0 %v941
    %1491 = vmatpush1.bf16.msra.mxu0 %v940
    %1492 = vmatprep.subr.bf16.mxu0 %v937
    %1493 = vmatpush1.bf16.msra.mxu0 %v936
    %1494 = vmatprep.subr.bf16.mxu0 %v933
    %1495 = vmatpush1.bf16.msra.mxu0 %v932
    %1496 = vmatprep.subr.bf16.mxu0 %v929
    %1497 = vmatpush1.bf16.msra.mxu0 %v928
    %1498 = vmatprep.subr.bf16.mxu0 %v925
    %1499 = vmatpush1.bf16.msra.mxu0 %v924
    %1500 = vmatprep.subr.bf16.mxu0 %v921
    %1501 = vmatpush1.bf16.msra.mxu0 %v920
    %1502 = vmatprep.subr.bf16.mxu0 %v981
    %1503 = vmatpush2.bf16.msra.mxu0 %v980
    %1504 = vmatprep.subr.bf16.mxu0 %v977
    %1505 = vmatpush2.bf16.msra.mxu0 %v976
    %1506 = vmatprep.subr.bf16.mxu0 %v973
    %1507 = vmatpush2.bf16.msra.mxu0 %v972
    %1508 = vmatprep.subr.bf16.mxu0 %v969
    %1509 = vmatpush2.bf16.msra.mxu0 %v968
    %1510 = vmatprep.subr.bf16.mxu0 %v965
    %1511 = vmatpush2.bf16.msra.mxu0 %v964
    %1512 = vmatprep.subr.bf16.mxu0 %v961
    %1513 = vmatpush2.bf16.msra.mxu0 %v960
    %1514 = vmatprep.subr.bf16.mxu0 %v957
    %1515 = vmatpush2.bf16.msra.mxu0 %v956
    %1516 = vmatprep.subr.bf16.mxu0 %v953
    %1517 = vmatpush2.bf16.msra.mxu0 %v952
    %1518 = vmatprep.mubr.bf16.mxu0 %v106
    %1519 = vmatmul.mubr.bf16.gmra.mxu0 %v105
    %v1520 = vpop.f32.mrf.mxu0
    %v1521 = vadd.f32 %v321, %v1520
    %v1522 = vpop.f32.mrf.mxu0
    %v1523 = vadd.f32 %v325, %v1522
    %v1524 = vpop.f32.mrf.mxu0
    %v1525 = vadd.f32 %v321, %v1524
    %v1526 = vpop.f32.mrf.mxu0
    %v1527 = vadd.f32 %v325, %v1526
    %1528 = vdwg.mxu0
    %1529 = vmatprep.subr.bf16.mxu0 %v1013
    %1530 = vmatpush1.bf16.msra.mxu0 %v1012
    %1531 = vmatprep.subr.bf16.mxu0 %v1009
    %1532 = vmatpush1.bf16.msra.mxu0 %v1008
    %1533 = vmatprep.subr.bf16.mxu0 %v1005
    %1534 = vmatpush1.bf16.msra.mxu0 %v1004
    %1535 = vmatprep.subr.bf16.mxu0 %v1001
    %1536 = vmatpush1.bf16.msra.mxu0 %v1000
    %1537 = vmatprep.subr.bf16.mxu0 %v997
    %1538 = vmatpush1.bf16.msra.mxu0 %v996
    %1539 = vmatprep.subr.bf16.mxu0 %v993
    %1540 = vmatpush1.bf16.msra.mxu0 %v992
    %1541 = vmatprep.subr.bf16.mxu0 %v989
    %1542 = vmatpush1.bf16.msra.mxu0 %v988
    %1543 = vmatprep.subr.bf16.mxu0 %v985
    %1544 = vmatpush1.bf16.msra.mxu0 %v984
    %1545 = vmatprep.subr.bf16.mxu0 %v1045
    %1546 = vmatpush2.bf16.msra.mxu0 %v1044
    %1547 = vmatprep.subr.bf16.mxu0 %v1041
    %1548 = vmatpush2.bf16.msra.mxu0 %v1040
    %1549 = vmatprep.subr.bf16.mxu0 %v1037
    %1550 = vmatpush2.bf16.msra.mxu0 %v1036
    %1551 = vmatprep.subr.bf16.mxu0 %v1033
    %1552 = vmatpush2.bf16.msra.mxu0 %v1032
    %1553 = vmatprep.subr.bf16.mxu0 %v1029
    %1554 = vmatpush2.bf16.msra.mxu0 %v1028
    %1555 = vmatprep.subr.bf16.mxu0 %v1025
    %1556 = vmatpush2.bf16.msra.mxu0 %v1024
    %1557 = vmatprep.subr.bf16.mxu0 %v1021
    %1558 = vmatpush2.bf16.msra.mxu0 %v1020
    %1559 = vmatprep.subr.bf16.mxu0 %v1017
    %1560 = vmatpush2.bf16.msra.mxu0 %v1016
    %1561 = vmatprep.mubr.bf16.mxu0 %v108
    %1562 = vmatmul.mubr.bf16.gmra.mxu0 %v107
    %v1563 = vpop.f32.mrf.mxu0
    %v1564 = vadd.f32 %v1521, %v1563
    %v1565 = vpop.f32.mrf.mxu0
    %v1566 = vadd.f32 %v1523, %v1565
    %v1567 = vpop.f32.mrf.mxu0
    %v1568 = vadd.f32 %v1525, %v1567
    %v1569 = vpop.f32.mrf.mxu0
    %v1570 = vadd.f32 %v1527, %v1569
    %1571 = vdwg.mxu0
    %1572 = vmatprep.subr.bf16.mxu0 %v1077
    %1573 = vmatpush1.bf16.msra.mxu0 %v1076
    %1574 = vmatprep.subr.bf16.mxu0 %v1073
    %1575 = vmatpush1.bf16.msra.mxu0 %v1072
    %1576 = vmatprep.subr.bf16.mxu0 %v1069
    %1577 = vmatpush1.bf16.msra.mxu0 %v1068
    %1578 = vmatprep.subr.bf16.mxu0 %v1065
    %1579 = vmatpush1.bf16.msra.mxu0 %v1064
    %1580 = vmatprep.subr.bf16.mxu0 %v1061
    %1581 = vmatpush1.bf16.msra.mxu0 %v1060
    %1582 = vmatprep.subr.bf16.mxu0 %v1057
    %1583 = vmatpush1.bf16.msra.mxu0 %v1056
    %1584 = vmatprep.subr.bf16.mxu0 %v1053
    %1585 = vmatpush1.bf16.msra.mxu0 %v1052
    %1586 = vmatprep.subr.bf16.mxu0 %v1049
    %1587 = vmatpush1.bf16.msra.mxu0 %v1048
    %1588 = vmatprep.subr.bf16.mxu0 %v1109
    %1589 = vmatpush2.bf16.msra.mxu0 %v1108
    %1590 = vmatprep.subr.bf16.mxu0 %v1105
    %1591 = vmatpush2.bf16.msra.mxu0 %v1104
    %1592 = vmatprep.subr.bf16.mxu0 %v1101
    %1593 = vmatpush2.bf16.msra.mxu0 %v1100
    %1594 = vmatprep.subr.bf16.mxu0 %v1097
    %1595 = vmatpush2.bf16.msra.mxu0 %v1096
    %1596 = vmatprep.subr.bf16.mxu0 %v1093
    %1597 = vmatpush2.bf16.msra.mxu0 %v1092
    %1598 = vmatprep.subr.bf16.mxu0 %v1089
    %1599 = vmatpush2.bf16.msra.mxu0 %v1088
    %1600 = vmatprep.subr.bf16.mxu0 %v1085
    %1601 = vmatpush2.bf16.msra.mxu0 %v1084
    %1602 = vmatprep.subr.bf16.mxu0 %v1081
    %1603 = vmatpush2.bf16.msra.mxu0 %v1080
    %1604 = vmatprep.mubr.bf16.mxu0 %v110
    %1605 = vmatmul.mubr.bf16.gmra.mxu0 %v109
    %v1606 = vpop.f32.mrf.mxu0
    %v1607 = vadd.f32 %v1564, %v1606
    %v1608 = vpop.f32.mrf.mxu0
    %v1609 = vadd.f32 %v1566, %v1608
    %v1610 = vpop.f32.mrf.mxu0
    %v1611 = vadd.f32 %v1568, %v1610
    %v1612 = vpop.f32.mrf.mxu0
    %v1613 = vadd.f32 %v1570, %v1612
    %1614 = vdwg.mxu0
    %1615 = vmatprep.subr.bf16.mxu0 0
    %1616 = vmatpush1.bf16.msra.mxu0 0
    %1617 = vmatprep.subr.bf16.mxu0 0
    %1618 = vmatpush1.bf16.msra.mxu0 0
    %1619 = vmatprep.subr.bf16.mxu0 0
    %1620 = vmatpush1.bf16.msra.mxu0 0
    %1621 = vmatprep.subr.bf16.mxu0 0
    %1622 = vmatpush1.bf16.msra.mxu0 0
    %1623 = vmatprep.subr.bf16.mxu0 0
    %1624 = vmatpush1.bf16.msra.mxu0 0
    %1625 = vmatprep.subr.bf16.mxu0 0
    %1626 = vmatpush1.bf16.msra.mxu0 0
    %1627 = vmatprep.subr.bf16.mxu0 0
    %1628 = vmatpush1.bf16.msra.mxu0 0
    %1629 = vmatprep.subr.bf16.mxu0 %v1113
    %1630 = vmatpush1.bf16.msra.mxu0 %v1112
    %1631 = vmatprep.subr.bf16.mxu0 0
    %1632 = vmatpush2.bf16.msra.mxu0 0
    %1633 = vmatprep.subr.bf16.mxu0 0
    %1634 = vmatpush2.bf16.msra.mxu0 0
    %1635 = vmatprep.subr.bf16.mxu0 0
    %1636 = vmatpush2.bf16.msra.mxu0 0
    %1637 = vmatprep.subr.bf16.mxu0 0
    %1638 = vmatpush2.bf16.msra.mxu0 0
    %1639 = vmatprep.subr.bf16.mxu0 0
    %1640 = vmatpush2.bf16.msra.mxu0 0
    %1641 = vmatprep.subr.bf16.mxu0 0
    %1642 = vmatpush2.bf16.msra.mxu0 0
    %1643 = vmatprep.subr.bf16.mxu0 0
    %1644 = vmatpush2.bf16.msra.mxu0 0
    %1645 = vmatprep.subr.bf16.mxu0 0
    %1646 = vmatpush2.bf16.msra.mxu0 0
    %1647 = vmatprep.mubr.bf16.mxu0 0
    %1648 = vmatmul.mubr.bf16.gmra.mxu0 %v1312
    %v1649 = vpop.f32.mrf.mxu0
    %v1650 = vadd.f32 %v1607, %v1649
    %v1651 = vpop.f32.mrf.mxu0
    %v1652 = vadd.f32 %v1609, %v1651
    %v1653 = vpop.f32.mrf.mxu0
    %v1654 = vadd.f32 %v1611, %v1653
    %v1655 = vpop.f32.mrf.mxu0
    %v1656 = vadd.f32 %v1613, %v1655
    %1657 = vdwg.mxu0
    %v1658 = vmul.f32 %v1478, 0.2
    %v1659 = vmul.f32 %v1480, 0.2
    %v1660 = vmul.f32 %v1650, 0.2
    %v1661 = vmul.f32 %v1652, 0.2
    %v1662 = vmul.f32 %v1482, 0.2
    %v1663 = vmul.f32 %v1484, 0.2
    %v1664 = vmul.f32 %v1654, 0.2
    %v1665 = vmul.f32 %v1656, 0.2
    %v1666 = vmax.f32 %v1478, %v1658
    %v1667 = vmax.f32 %v1480, %v1659
    %v1668 = vmax.f32 %v1650, %v1660
    %v1669 = vmax.f32 %v1652, %v1661
    %v1670 = vmax.f32 %v1482, %v1662
    %v1671 = vmax.f32 %v1484, %v1663
    %v1672 = vmax.f32 %v1654, %v1664
    %v1673 = vmax.f32 %v1656, %v1665
    %v1674 = vpack.c.bf16 %v1670, %v1666
    %v1675 = vpack.c.bf16 %v1671, %v1667
    %v1676 = vpack.c.bf16 %v1672, %v1668
    %v1677 = vpack.c.bf16 %v1673, %v1669
    %v1678 = vld [vmem:[#allocation8] sm:$0xff]
    %v1679 = vld [vmem:[#allocation8 + $0x8] sm:$0xff]
    %v1680 = vld [vmem:[#allocation8 + $0x10] sm:$0xff]
    %v1681 = vld [vmem:[#allocation8 + $0x18] sm:$0xff]
    %v1682 = vld [vmem:[#allocation8 + $0x20] sm:$0xff]
    %v1683 = vld [vmem:[#allocation8 + $0x28] sm:$0xff]
    %v1684 = vld [vmem:[#allocation8 + $0x30] sm:$0xff]
    %v1685 = vld [vmem:[#allocation8 + $0x38] sm:$0xff]
    %v1686 = vld [vmem:[#allocation8 + $0x40] sm:$0xff]
    %v1687 = vld [vmem:[#allocation8 + $0x48] sm:$0xff]
    %v1688 = vld [vmem:[#allocation8 + $0x50] sm:$0xff]
    %v1689 = vld [vmem:[#allocation8 + $0x58] sm:$0xff]
    %v1690 = vld [vmem:[#allocation8 + $0x60] sm:$0xff]
    %v1691 = vld [vmem:[#allocation8 + $0x68] sm:$0xff]
    %v1692 = vld [vmem:[#allocation8 + $0x70] sm:$0xff]
    %v1693 = vld [vmem:[#allocation8 + $0x78] sm:$0xff]
    %v1694 = vld [vmem:[#allocation8 + $0x80] sm:$0xff]
    %v1695 = vld [vmem:[#allocation8 + $0x88] sm:$0xff]
    %v1696 = vld [vmem:[#allocation8 + $0x90] sm:$0xff]
    %v1697 = vld [vmem:[#allocation8 + $0x98] sm:$0xff]
    %v1698 = vld [vmem:[#allocation8 + $0xa0] sm:$0xff]
    %v1699 = vld [vmem:[#allocation8 + $0xa8] sm:$0xff]
    %v1700 = vld [vmem:[#allocation8 + $0xb0] sm:$0xff]
    %v1701 = vld [vmem:[#allocation8 + $0xb8] sm:$0xff]
    %v1702 = vld [vmem:[#allocation8 + $0xc0] sm:$0xff]
    %v1703 = vld [vmem:[#allocation8 + $0xc8] sm:$0xff]
    %v1704 = vld [vmem:[#allocation8 + $0xd0] sm:$0xff]
    %v1705 = vld [vmem:[#allocation8 + $0xd8] sm:$0xff]
    %v1706 = vld [vmem:[#allocation8 + $0xe0] sm:$0xff]
    %v1707 = vld [vmem:[#allocation8 + $0xe8] sm:$0xff]
    %v1708 = vld [vmem:[#allocation8 + $0xf0] sm:$0xff]
    %v1709 = vld [vmem:[#allocation8 + $0xf8] sm:$0xff]
    %v1710 = vld [vmem:[#allocation8 + $0x100] sm:$0xff]
    %v1711 = vld [vmem:[#allocation8 + $0x108] sm:$0xff]
    %v1712 = vld [vmem:[#allocation8 + $0x110] sm:$0xff]
    %v1713 = vld [vmem:[#allocation8 + $0x118] sm:$0xff]
    %v1714 = vld [vmem:[#allocation8 + $0x120] sm:$0xff]
    %v1715 = vld [vmem:[#allocation8 + $0x128] sm:$0xff]
    %v1716 = vld [vmem:[#allocation8 + $0x130] sm:$0xff]
    %v1717 = vld [vmem:[#allocation8 + $0x138] sm:$0xff]
    %v1718 = vld [vmem:[#allocation8 + $0x140] sm:$0xff]
    %v1719 = vld [vmem:[#allocation8 + $0x148] sm:$0xff]
    %v1720 = vld [vmem:[#allocation8 + $0x150] sm:$0xff]
    %v1721 = vld [vmem:[#allocation8 + $0x158] sm:$0xff]
    %v1722 = vld [vmem:[#allocation8 + $0x160] sm:$0xff]
    %v1723 = vld [vmem:[#allocation8 + $0x168] sm:$0xff]
    %v1724 = vld [vmem:[#allocation8 + $0x170] sm:$0xff]
    %v1725 = vld [vmem:[#allocation8 + $0x178] sm:$0xff]
    %v1726 = vld [vmem:[#allocation8 + $0x180] sm:$0xff]
    %v1727 = vld [vmem:[#allocation8 + $0x188] sm:$0xff]
    %v1728 = vld [vmem:[#allocation8 + $0x190] sm:$0xff]
    %v1729 = vld [vmem:[#allocation8 + $0x198] sm:$0xff]
    %v1730 = vld [vmem:[#allocation8 + $0x1a0] sm:$0xff]
    %v1731 = vld [vmem:[#allocation8 + $0x1a8] sm:$0xff]
    %v1732 = vld [vmem:[#allocation8 + $0x1b0] sm:$0xff]
    %v1733 = vld [vmem:[#allocation8 + $0x1b8] sm:$0xff]
    %v1734 = vld [vmem:[#allocation8 + $0x1c0] sm:$0xff]
    %v1735 = vld [vmem:[#allocation8 + $0x1c8] sm:$0xff]
    %v1736 = vld [vmem:[#allocation8 + $0x1d0] sm:$0xff]
    %v1737 = vld [vmem:[#allocation8 + $0x1d8] sm:$0xff]
    %v1738 = vld [vmem:[#allocation8 + $0x1e0] sm:$0xff]
    %v1739 = vld [vmem:[#allocation8 + $0x1e8] sm:$0xff]
    %v1740 = vld [vmem:[#allocation8 + $0x1f0] sm:$0xff]
    %v1741 = vld [vmem:[#allocation8 + $0x1f8] sm:$0xff]
    %v1742 = vld [vmem:[%s4] sm:$0x3]
    %v1744 = vlaneseq
    %v1745 = vshrl.u32 %v1744, 7
    %v1746 = vsub.s32 0, %v1745
    %v1747 = vrot.slane %v1742, %v1746
    %v1748 = vlaneseq
    %v1749 = vshrl.u32 %v1748, 7
    %v1750 = vsub.s32 1, %v1749
    %v1751 = vrot.slane %v1742, %v1750
    %v1818 = vunpack.c.l.b16 %v1678
    %v1819 = vunpack.c.h.b16 %v1678
    %v1820 = vunpack.c.l.b16 %v1679
    %v1821 = vunpack.c.h.b16 %v1679
    %v1822 = vunpack.c.l.b16 %v1680
    %v1823 = vunpack.c.h.b16 %v1680
    %v1824 = vunpack.c.l.b16 %v1681
    %v1825 = vunpack.c.h.b16 %v1681
    %v1826 = vunpack.c.l.b16 %v1682
    %v1827 = vunpack.c.h.b16 %v1682
    %v1828 = vunpack.c.l.b16 %v1683
    %v1829 = vunpack.c.h.b16 %v1683
    %v1830 = vunpack.c.l.b16 %v1684
    %v1831 = vunpack.c.h.b16 %v1684
    %v1832 = vunpack.c.l.b16 %v1685
    %v1833 = vunpack.c.h.b16 %v1685
    %v1834 = vunpack.c.l.b16 %v1686
    %v1835 = vunpack.c.h.b16 %v1686
    %v1836 = vunpack.c.l.b16 %v1687
    %v1837 = vunpack.c.h.b16 %v1687
    %v1838 = vunpack.c.l.b16 %v1688
    %v1839 = vunpack.c.h.b16 %v1688
    %v1840 = vunpack.c.l.b16 %v1689
    %v1841 = vunpack.c.h.b16 %v1689
    %v1842 = vunpack.c.l.b16 %v1690
    %v1843 = vunpack.c.h.b16 %v1690
    %v1844 = vunpack.c.l.b16 %v1691
    %v1845 = vunpack.c.h.b16 %v1691
    %v1846 = vunpack.c.l.b16 %v1692
    %v1847 = vunpack.c.h.b16 %v1692
    %v1848 = vunpack.c.l.b16 %v1693
    %v1849 = vunpack.c.h.b16 %v1693
    %v1850 = vunpack.c.l.b16 %v1694
    %v1851 = vunpack.c.h.b16 %v1694
    %v1852 = vunpack.c.l.b16 %v1695
    %v1853 = vunpack.c.h.b16 %v1695
    %v1854 = vunpack.c.l.b16 %v1696
    %v1855 = vunpack.c.h.b16 %v1696
    %v1856 = vunpack.c.l.b16 %v1697
    %v1857 = vunpack.c.h.b16 %v1697
    %v1858 = vunpack.c.l.b16 %v1698
    %v1859 = vunpack.c.h.b16 %v1698
    %v1860 = vunpack.c.l.b16 %v1699
    %v1861 = vunpack.c.h.b16 %v1699
    %v1862 = vunpack.c.l.b16 %v1700
    %v1863 = vunpack.c.h.b16 %v1700
    %v1864 = vunpack.c.l.b16 %v1701
    %v1865 = vunpack.c.h.b16 %v1701
    %v1866 = vunpack.c.l.b16 %v1702
    %v1867 = vunpack.c.h.b16 %v1702
    %v1868 = vunpack.c.l.b16 %v1703
    %v1869 = vunpack.c.h.b16 %v1703
    %v1870 = vunpack.c.l.b16 %v1704
    %v1871 = vunpack.c.h.b16 %v1704
    %v1872 = vunpack.c.l.b16 %v1705
    %v1873 = vunpack.c.h.b16 %v1705
    %v1874 = vunpack.c.l.b16 %v1706
    %v1875 = vunpack.c.h.b16 %v1706
    %v1876 = vunpack.c.l.b16 %v1707
    %v1877 = vunpack.c.h.b16 %v1707
    %v1878 = vunpack.c.l.b16 %v1708
    %v1879 = vunpack.c.h.b16 %v1708
    %v1880 = vunpack.c.l.b16 %v1709
    %v1881 = vunpack.c.h.b16 %v1709
    %v1882 = vunpack.c.l.b16 %v1710
    %v1883 = vunpack.c.h.b16 %v1710
    %v1884 = vunpack.c.l.b16 %v1711
    %v1885 = vunpack.c.h.b16 %v1711
    %v1886 = vunpack.c.l.b16 %v1712
    %v1887 = vunpack.c.h.b16 %v1712
    %v1888 = vunpack.c.l.b16 %v1713
    %v1889 = vunpack.c.h.b16 %v1713
    %v1890 = vunpack.c.l.b16 %v1714
    %v1891 = vunpack.c.h.b16 %v1714
    %v1892 = vunpack.c.l.b16 %v1715
    %v1893 = vunpack.c.h.b16 %v1715
    %v1894 = vunpack.c.l.b16 %v1716
    %v1895 = vunpack.c.h.b16 %v1716
    %v1896 = vunpack.c.l.b16 %v1717
    %v1897 = vunpack.c.h.b16 %v1717
    %v1898 = vunpack.c.l.b16 %v1718
    %v1899 = vunpack.c.h.b16 %v1718
    %v1900 = vunpack.c.l.b16 %v1719
    %v1901 = vunpack.c.h.b16 %v1719
    %v1902 = vunpack.c.l.b16 %v1720
    %v1903 = vunpack.c.h.b16 %v1720
    %v1904 = vunpack.c.l.b16 %v1721
    %v1905 = vunpack.c.h.b16 %v1721
    %v1906 = vunpack.c.l.b16 %v1722
    %v1907 = vunpack.c.h.b16 %v1722
    %v1908 = vunpack.c.l.b16 %v1723
    %v1909 = vunpack.c.h.b16 %v1723
    %v1910 = vunpack.c.l.b16 %v1724
    %v1911 = vunpack.c.h.b16 %v1724
    %v1912 = vunpack.c.l.b16 %v1725
    %v1913 = vunpack.c.h.b16 %v1725
    %v1914 = vunpack.c.l.b16 %v1726
    %v1915 = vunpack.c.h.b16 %v1726
    %v1916 = vunpack.c.l.b16 %v1727
    %v1917 = vunpack.c.h.b16 %v1727
    %v1918 = vunpack.c.l.b16 %v1728
    %v1919 = vunpack.c.h.b16 %v1728
    %v1920 = vunpack.c.l.b16 %v1729
    %v1921 = vunpack.c.h.b16 %v1729
    %v1922 = vunpack.c.l.b16 %v1730
    %v1923 = vunpack.c.h.b16 %v1730
    %v1924 = vunpack.c.l.b16 %v1731
    %v1925 = vunpack.c.h.b16 %v1731
    %v1926 = vunpack.c.l.b16 %v1732
    %v1927 = vunpack.c.h.b16 %v1732
    %v1928 = vunpack.c.l.b16 %v1733
    %v1929 = vunpack.c.h.b16 %v1733
    %v1930 = vunpack.c.l.b16 %v1734
    %v1931 = vunpack.c.h.b16 %v1734
    %v1932 = vunpack.c.l.b16 %v1735
    %v1933 = vunpack.c.h.b16 %v1735
    %v1934 = vunpack.c.l.b16 %v1736
    %v1935 = vunpack.c.h.b16 %v1736
    %v1936 = vunpack.c.l.b16 %v1737
    %v1937 = vunpack.c.h.b16 %v1737
    %v1938 = vunpack.c.l.b16 %v1738
    %v1939 = vunpack.c.h.b16 %v1738
    %v1940 = vunpack.c.l.b16 %v1739
    %v1941 = vunpack.c.h.b16 %v1739
    %v1942 = vunpack.c.l.b16 %v1740
    %v1943 = vunpack.c.h.b16 %v1740
    %v1944 = vunpack.c.l.b16 %v1741
    %v1945 = vunpack.c.h.b16 %v1741
    %v1946 = vpack.c.b16 %v1820, %v1818
    %v1947 = vpack.c.b16 %v1821, %v1819
    %v1948 = vpack.c.b16 %v1824, %v1822
    %v1949 = vpack.c.b16 %v1825, %v1823
    %v1950 = vpack.c.b16 %v1828, %v1826
    %v1951 = vpack.c.b16 %v1829, %v1827
    %v1952 = vpack.c.b16 %v1832, %v1830
    %v1953 = vpack.c.b16 %v1833, %v1831
    %v1954 = vpack.c.b16 %v1836, %v1834
    %v1955 = vpack.c.b16 %v1837, %v1835
    %v1956 = vpack.c.b16 %v1840, %v1838
    %v1957 = vpack.c.b16 %v1841, %v1839
    %v1958 = vpack.c.b16 %v1844, %v1842
    %v1959 = vpack.c.b16 %v1845, %v1843
    %v1960 = vpack.c.b16 %v1848, %v1846
    %v1961 = vpack.c.b16 %v1849, %v1847
    %v1962 = vpack.c.b16 %v1852, %v1850
    %v1963 = vpack.c.b16 %v1853, %v1851
    %v1964 = vpack.c.b16 %v1856, %v1854
    %v1965 = vpack.c.b16 %v1857, %v1855
    %v1966 = vpack.c.b16 %v1860, %v1858
    %v1967 = vpack.c.b16 %v1861, %v1859
    %v1968 = vpack.c.b16 %v1864, %v1862
    %v1969 = vpack.c.b16 %v1865, %v1863
    %v1970 = vpack.c.b16 %v1868, %v1866
    %v1971 = vpack.c.b16 %v1869, %v1867
    %v1972 = vpack.c.b16 %v1872, %v1870
    %v1973 = vpack.c.b16 %v1873, %v1871
    %v1974 = vpack.c.b16 %v1876, %v1874
    %v1975 = vpack.c.b16 %v1877, %v1875
    %v1976 = vpack.c.b16 %v1880, %v1878
    %v1977 = vpack.c.b16 %v1881, %v1879
    %v1978 = vpack.c.b16 %v1884, %v1882
    %v1979 = vpack.c.b16 %v1885, %v1883
    %v1980 = vpack.c.b16 %v1888, %v1886
    %v1981 = vpack.c.b16 %v1889, %v1887
    %v1982 = vpack.c.b16 %v1892, %v1890
    %v1983 = vpack.c.b16 %v1893, %v1891
    %v1984 = vpack.c.b16 %v1896, %v1894
    %v1985 = vpack.c.b16 %v1897, %v1895
    %v1986 = vpack.c.b16 %v1900, %v1898
    %v1987 = vpack.c.b16 %v1901, %v1899
    %v1988 = vpack.c.b16 %v1904, %v1902
    %v1989 = vpack.c.b16 %v1905, %v1903
    %v1990 = vpack.c.b16 %v1908, %v1906
    %v1991 = vpack.c.b16 %v1909, %v1907
    %v1992 = vpack.c.b16 %v1912, %v1910
    %v1993 = vpack.c.b16 %v1913, %v1911
    %v1994 = vpack.c.b16 %v1916, %v1914
    %v1995 = vpack.c.b16 %v1917, %v1915
    %v1996 = vpack.c.b16 %v1920, %v1918
    %v1997 = vpack.c.b16 %v1921, %v1919
    %v1998 = vpack.c.b16 %v1924, %v1922
    %v1999 = vpack.c.b16 %v1925, %v1923
    %v2000 = vpack.c.b16 %v1928, %v1926
    %v2001 = vpack.c.b16 %v1929, %v1927
    %v2002 = vpack.c.b16 %v1932, %v1930
    %v2003 = vpack.c.b16 %v1933, %v1931
    %v2004 = vpack.c.b16 %v1936, %v1934
    %v2005 = vpack.c.b16 %v1937, %v1935
    %v2006 = vpack.c.b16 %v1940, %v1938
    %v2007 = vpack.c.b16 %v1941, %v1939
    %v2008 = vpack.c.b16 %v1944, %v1942
    %v2009 = vpack.c.b16 %v1945, %v1943
    %2074 = vmatprep.subr.bf16.mxu0 %v1961
    %2075 = vmatpush1.bf16.msra.mxu0 %v1960
    %2076 = vmatprep.subr.bf16.mxu0 %v1959
    %2077 = vmatpush1.bf16.msra.mxu0 %v1958
    %2078 = vmatprep.subr.bf16.mxu0 %v1957
    %2079 = vmatpush1.bf16.msra.mxu0 %v1956
    %2080 = vmatprep.subr.bf16.mxu0 %v1955
    %2081 = vmatpush1.bf16.msra.mxu0 %v1954
    %2082 = vmatprep.subr.bf16.mxu0 %v1953
    %2083 = vmatpush1.bf16.msra.mxu0 %v1952
    %2084 = vmatprep.subr.bf16.mxu0 %v1951
    %2085 = vmatpush1.bf16.msra.mxu0 %v1950
    %2086 = vmatprep.subr.bf16.mxu0 %v1949
    %2087 = vmatpush1.bf16.msra.mxu0 %v1948
    %2088 = vmatprep.subr.bf16.mxu0 %v1947
    %2089 = vmatpush1.bf16.msra.mxu0 %v1946
    %2090 = vmatprep.subr.bf16.mxu0 %v1977
    %2091 = vmatpush2.bf16.msra.mxu0 %v1976
    %2092 = vmatprep.subr.bf16.mxu0 %v1975
    %2093 = vmatpush2.bf16.msra.mxu0 %v1974
    %2094 = vmatprep.subr.bf16.mxu0 %v1973
    %2095 = vmatpush2.bf16.msra.mxu0 %v1972
    %2096 = vmatprep.subr.bf16.mxu0 %v1971
    %2097 = vmatpush2.bf16.msra.mxu0 %v1970
    %2098 = vmatprep.subr.bf16.mxu0 %v1969
    %2099 = vmatpush2.bf16.msra.mxu0 %v1968
    %2100 = vmatprep.subr.bf16.mxu0 %v1967
    %2101 = vmatpush2.bf16.msra.mxu0 %v1966
    %2102 = vmatprep.subr.bf16.mxu0 %v1965
    %2103 = vmatpush2.bf16.msra.mxu0 %v1964
    %2104 = vmatprep.subr.bf16.mxu0 %v1963
    %2105 = vmatpush2.bf16.msra.mxu0 %v1962
    %2106 = vmatprep.mubr.bf16.mxu0 %v1675
    %2107 = vmatmul.mubr.bf16.gmra.mxu0 %v1674
    %v2108 = vpop.f32.mrf.mxu0
    %v2109 = vadd.f32 %v1747, %v2108
    %v2110 = vpop.f32.mrf.mxu0
    %v2111 = vadd.f32 %v1751, %v2110
    %v2112 = vpop.f32.mrf.mxu0
    %v2113 = vadd.f32 %v1747, %v2112
    %v2114 = vpop.f32.mrf.mxu0
    %v2115 = vadd.f32 %v1751, %v2114
    %2116 = vdwg.mxu0
    %2117 = vmatprep.subr.bf16.mxu0 %v1993
    %2118 = vmatpush1.bf16.msra.mxu0 %v1992
    %2119 = vmatprep.subr.bf16.mxu0 %v1991
    %2120 = vmatpush1.bf16.msra.mxu0 %v1990
    %2121 = vmatprep.subr.bf16.mxu0 %v1989
    %2122 = vmatpush1.bf16.msra.mxu0 %v1988
    %2123 = vmatprep.subr.bf16.mxu0 %v1987
    %2124 = vmatpush1.bf16.msra.mxu0 %v1986
    %2125 = vmatprep.subr.bf16.mxu0 %v1985
    %2126 = vmatpush1.bf16.msra.mxu0 %v1984
    %2127 = vmatprep.subr.bf16.mxu0 %v1983
    %2128 = vmatpush1.bf16.msra.mxu0 %v1982
    %2129 = vmatprep.subr.bf16.mxu0 %v1981
    %2130 = vmatpush1.bf16.msra.mxu0 %v1980
    %2131 = vmatprep.subr.bf16.mxu0 %v1979
    %2132 = vmatpush1.bf16.msra.mxu0 %v1978
    %2133 = vmatprep.subr.bf16.mxu0 %v2009
    %2134 = vmatpush2.bf16.msra.mxu0 %v2008
    %2135 = vmatprep.subr.bf16.mxu0 %v2007
    %2136 = vmatpush2.bf16.msra.mxu0 %v2006
    %2137 = vmatprep.subr.bf16.mxu0 %v2005
    %2138 = vmatpush2.bf16.msra.mxu0 %v2004
    %2139 = vmatprep.subr.bf16.mxu0 %v2003
    %2140 = vmatpush2.bf16.msra.mxu0 %v2002
    %2141 = vmatprep.subr.bf16.mxu0 %v2001
    %2142 = vmatpush2.bf16.msra.mxu0 %v2000
    %2143 = vmatprep.subr.bf16.mxu0 %v1999
    %2144 = vmatpush2.bf16.msra.mxu0 %v1998
    %2145 = vmatprep.subr.bf16.mxu0 %v1997
    %2146 = vmatpush2.bf16.msra.mxu0 %v1996
    %2147 = vmatprep.subr.bf16.mxu0 %v1995
    %2148 = vmatpush2.bf16.msra.mxu0 %v1994
    %2149 = vmatprep.mubr.bf16.mxu0 %v1677
    %2150 = vmatmul.mubr.bf16.gmra.mxu0 %v1676
    %v2151 = vpop.f32.mrf.mxu0
    %v2152 = vadd.f32 %v2109, %v2151
    %v2153 = vpop.f32.mrf.mxu0
    %v2154 = vadd.f32 %v2111, %v2153
    %v2155 = vpop.f32.mrf.mxu0
    %v2156 = vadd.f32 %v2113, %v2155
    %v2157 = vpop.f32.mrf.mxu0
    %v2158 = vadd.f32 %v2115, %v2157
    %2159 = vdwg.mxu0
    %v2160 = vmul.f32 %v2152, 0.2
    %v2161 = vmul.f32 %v2154, 0.2
    %v2162 = vmul.f32 %v2156, 0.2
    %v2163 = vmul.f32 %v2158, 0.2
    %v2164 = vmax.f32 %v2152, %v2160
    %v2165 = vmax.f32 %v2154, %v2161
    %v2166 = vmax.f32 %v2156, %v2162
    %v2167 = vmax.f32 %v2158, %v2163
    %v2168 = vpack.c.bf16 %v2166, %v2164
    %v2169 = vpack.c.bf16 %v2167, %v2165
    %v2170 = vld [vmem:[#allocation9] sm:$0xf]
    %v2171 = vld [vmem:[#allocation9 + $0x4] sm:$0xf]
    %v2172 = vld [vmem:[#allocation9 + $0x8] sm:$0xf]
    %v2173 = vld [vmem:[#allocation9 + $0xc] sm:$0xf]
    %v2174 = vld [vmem:[#allocation9 + $0x10] sm:$0xf]
    %v2175 = vld [vmem:[#allocation9 + $0x14] sm:$0xf]
    %v2176 = vld [vmem:[#allocation9 + $0x18] sm:$0xf]
    %v2177 = vld [vmem:[#allocation9 + $0x1c] sm:$0xf]
    %v2178 = vld [vmem:[#allocation9 + $0x20] sm:$0xf]
    %v2179 = vld [vmem:[#allocation9 + $0x24] sm:$0xf]
    %v2180 = vld [vmem:[#allocation9 + $0x28] sm:$0xf]
    %v2181 = vld [vmem:[#allocation9 + $0x2c] sm:$0xf]
    %v2182 = vld [vmem:[#allocation9 + $0x30] sm:$0xf]
    %v2183 = vld [vmem:[#allocation9 + $0x34] sm:$0xf]
    %v2184 = vld [vmem:[#allocation9 + $0x38] sm:$0xf]
    %v2185 = vld [vmem:[#allocation9 + $0x3c] sm:$0xf]
    %v2186 = vld [vmem:[#allocation9 + $0x40] sm:$0xf]
    %v2187 = vld [vmem:[#allocation9 + $0x44] sm:$0xf]
    %v2188 = vld [vmem:[#allocation9 + $0x48] sm:$0xf]
    %v2189 = vld [vmem:[#allocation9 + $0x4c] sm:$0xf]
    %v2190 = vld [vmem:[#allocation9 + $0x50] sm:$0xf]
    %v2191 = vld [vmem:[#allocation9 + $0x54] sm:$0xf]
    %v2192 = vld [vmem:[#allocation9 + $0x58] sm:$0xf]
    %v2193 = vld [vmem:[#allocation9 + $0x5c] sm:$0xf]
    %v2194 = vld [vmem:[#allocation9 + $0x60] sm:$0xf]
    %v2195 = vld [vmem:[#allocation9 + $0x64] sm:$0xf]
    %v2196 = vld [vmem:[#allocation9 + $0x68] sm:$0xf]
    %v2197 = vld [vmem:[#allocation9 + $0x6c] sm:$0xf]
    %v2198 = vld [vmem:[#allocation9 + $0x70] sm:$0xf]
    %v2199 = vld [vmem:[#allocation9 + $0x74] sm:$0xf]
    %v2200 = vld [vmem:[#allocation9 + $0x78] sm:$0xf]
    %v2201 = vld [vmem:[#allocation9 + $0x7c] sm:$0xf]
    %v2202 = vld [vmem:[%s6] sm:$0x1]
    %v2204 = vlaneseq
    %v2205 = vshrl.u32 %v2204, 7
    %v2206 = vsub.s32 0, %v2205
    %v2207 = vrot.slane %v2202, %v2206
    %v2241 = vunpack.c.l.b16 %v2170
    %v2242 = vunpack.c.l.b16 %v2171
    %v2243 = vunpack.c.l.b16 %v2172
    %v2244 = vunpack.c.l.b16 %v2173
    %v2245 = vunpack.c.l.b16 %v2174
    %v2246 = vunpack.c.l.b16 %v2175
    %v2247 = vunpack.c.l.b16 %v2176
    %v2248 = vunpack.c.l.b16 %v2177
    %v2249 = vunpack.c.l.b16 %v2178
    %v2250 = vunpack.c.l.b16 %v2179
    %v2251 = vunpack.c.l.b16 %v2180
    %v2252 = vunpack.c.l.b16 %v2181
    %v2253 = vunpack.c.l.b16 %v2182
    %v2254 = vunpack.c.l.b16 %v2183
    %v2255 = vunpack.c.l.b16 %v2184
    %v2256 = vunpack.c.l.b16 %v2185
    %v2257 = vunpack.c.l.b16 %v2186
    %v2258 = vunpack.c.l.b16 %v2187
    %v2259 = vunpack.c.l.b16 %v2188
    %v2260 = vunpack.c.l.b16 %v2189
    %v2261 = vunpack.c.l.b16 %v2190
    %v2262 = vunpack.c.l.b16 %v2191
    %v2263 = vunpack.c.l.b16 %v2192
    %v2264 = vunpack.c.l.b16 %v2193
    %v2265 = vunpack.c.l.b16 %v2194
    %v2266 = vunpack.c.l.b16 %v2195
    %v2267 = vunpack.c.l.b16 %v2196
    %v2268 = vunpack.c.l.b16 %v2197
    %v2269 = vunpack.c.l.b16 %v2198
    %v2270 = vunpack.c.l.b16 %v2199
    %v2271 = vunpack.c.l.b16 %v2200
    %v2272 = vunpack.c.l.b16 %v2201
    %v2273 = vpack.c.b16 %v2242, %v2241
    %v2274 = vpack.c.b16 %v2244, %v2243
    %v2275 = vpack.c.b16 %v2246, %v2245
    %v2276 = vpack.c.b16 %v2248, %v2247
    %v2277 = vpack.c.b16 %v2250, %v2249
    %v2278 = vpack.c.b16 %v2252, %v2251
    %v2279 = vpack.c.b16 %v2254, %v2253
    %v2280 = vpack.c.b16 %v2256, %v2255
    %v2281 = vpack.c.b16 %v2258, %v2257
    %v2282 = vpack.c.b16 %v2260, %v2259
    %v2283 = vpack.c.b16 %v2262, %v2261
    %v2284 = vpack.c.b16 %v2264, %v2263
    %v2285 = vpack.c.b16 %v2266, %v2265
    %v2286 = vpack.c.b16 %v2268, %v2267
    %v2287 = vpack.c.b16 %v2270, %v2269
    %v2288 = vpack.c.b16 %v2272, %v2271
    %2305 = vmatprep.subr.bf16.mxu0 0
    %2306 = vmatpush1.bf16.msra.mxu0 %v2280
    %2307 = vmatprep.subr.bf16.mxu0 0
    %2308 = vmatpush1.bf16.msra.mxu0 %v2279
    %2309 = vmatprep.subr.bf16.mxu0 0
    %2310 = vmatpush1.bf16.msra.mxu0 %v2278
    %2311 = vmatprep.subr.bf16.mxu0 0
    %2312 = vmatpush1.bf16.msra.mxu0 %v2277
    %2313 = vmatprep.subr.bf16.mxu0 0
    %2314 = vmatpush1.bf16.msra.mxu0 %v2276
    %2315 = vmatprep.subr.bf16.mxu0 0
    %2316 = vmatpush1.bf16.msra.mxu0 %v2275
    %2317 = vmatprep.subr.bf16.mxu0 0
    %2318 = vmatpush1.bf16.msra.mxu0 %v2274
    %2319 = vmatprep.subr.bf16.mxu0 0
    %2320 = vmatpush1.bf16.msra.mxu0 %v2273
    %2321 = vmatprep.subr.bf16.mxu0 0
    %2322 = vmatpush2.bf16.msra.mxu0 %v2288
    %2323 = vmatprep.subr.bf16.mxu0 0
    %2324 = vmatpush2.bf16.msra.mxu0 %v2287
    %2325 = vmatprep.subr.bf16.mxu0 0
    %2326 = vmatpush2.bf16.msra.mxu0 %v2286
    %2327 = vmatprep.subr.bf16.mxu0 0
    %2328 = vmatpush2.bf16.msra.mxu0 %v2285
    %2329 = vmatprep.subr.bf16.mxu0 0
    %2330 = vmatpush2.bf16.msra.mxu0 %v2284
    %2331 = vmatprep.subr.bf16.mxu0 0
    %2332 = vmatpush2.bf16.msra.mxu0 %v2283
    %2333 = vmatprep.subr.bf16.mxu0 0
    %2334 = vmatpush2.bf16.msra.mxu0 %v2282
    %2335 = vmatprep.subr.bf16.mxu0 0
    %2336 = vmatpush2.bf16.msra.mxu0 %v2281
    %2337 = vmatprep.mubr.bf16.mxu0 %v2169
    %2338 = vmatmul.mubr.bf16.gmra.mxu0 %v2168
    %v2339 = vpop.f32.mrf.mxu0
    %v2340 = vadd.f32 %v2207, %v2339
    %v2341 = vpop.f32.mrf.mxu0
    %v2342 = vpop.f32.mrf.mxu0
    %v2343 = vadd.f32 %v2207, %v2342
    %v2344 = vpop.f32.mrf.mxu0
    %2345 = vdwg.mxu0
    %v2346 = vmul.f32 %v2340, 0.2
    %v2347 = vmul.f32 %v2343, 0.2
    %v2348 = vmax.f32 %v2340, %v2346
    %v2349 = vmax.f32 %v2343, %v2347
    %v2350 = vld [vmem:[%s7] sm:$0x1]
    %v2351 = vld [vmem:[#allocation2] sm:$0x1]
    %2353 = vset.pattern.permute.xlu0 0
    %2354 = vperm.xlu0 %2353, %v2351
    %v2355 = vpop.permute.xlu0 %2354
    %v2357 = vlaneseq
    %v2358 = vshrl.u32 %v2357, 7
    %v2359 = vsub.s32 0, %v2358
    %v2360 = vrot.slane %v2355, %v2359
    %2361 = vmatprep.subr.mxu0 0.0
    %2362 = vmatpush1.xpose.msra.mxu0 0.0
    %2363 = vmatprep.subr.mxu0 0.0
    %2364 = vmatpush1.xpose.msra.mxu0 0.0
    %2365 = vmatprep.subr.mxu0 0.0
    %2366 = vmatpush1.xpose.msra.mxu0 0.0
    %2367 = vmatprep.subr.mxu0 0.0
    %2368 = vmatpush1.xpose.msra.mxu0 0.0
    %2369 = vmatprep.subr.mxu0 0.0
    %2370 = vmatpush1.xpose.msra.mxu0 0.0
    %2371 = vmatprep.subr.mxu0 0.0
    %2372 = vmatpush1.xpose.msra.mxu0 0.0
    %2373 = vmatprep.subr.mxu0 0.0
    %2374 = vmatpush1.xpose.msra.mxu0 0.0
    %2375 = vmatprep.subr.mxu0 0.0
    %2376 = vmatpush1.xpose.msra.mxu0 0.0
    %2377 = vmatprep.subr.mxu0 0.0
    %2378 = vmatpush1.xpose.msra.mxu0 0.0
    %2379 = vmatprep.subr.mxu0 0.0
    %2380 = vmatpush1.xpose.msra.mxu0 0.0
    %2381 = vmatprep.subr.mxu0 0.0
    %2382 = vmatpush1.xpose.msra.mxu0 0.0
    %2383 = vmatprep.subr.mxu0 0.0
    %2384 = vmatpush1.xpose.msra.mxu0 0.0
    %2385 = vmatprep.subr.mxu0 0.0
    %2386 = vmatpush1.xpose.msra.mxu0 0.0
    %2387 = vmatprep.subr.mxu0 0.0
    %2388 = vmatpush1.xpose.msra.mxu0 0.0
    %2389 = vmatprep.subr.mxu0 0.0
    %2390 = vmatpush1.xpose.msra.mxu0 %v2349
    %2391 = vmatprep.subr.mxu0 0.0
    %2392 = vmatpush1.xpose.msra.mxu0 %v2348
    %2393 = vmatprep.subr.mxu0 0.0
    %2394 = vmatpush2.xpose.msra.mxu0 0.0
    %2395 = vmatprep.subr.mxu0 0.0
    %2396 = vmatpush2.xpose.msra.mxu0 0.0
    %2397 = vmatprep.subr.mxu0 0.0
    %2398 = vmatpush2.xpose.msra.mxu0 0.0
    %2399 = vmatprep.subr.mxu0 0.0
    %2400 = vmatpush2.xpose.msra.mxu0 0.0
    %2401 = vmatprep.subr.mxu0 0.0
    %2402 = vmatpush2.xpose.msra.mxu0 0.0
    %2403 = vmatprep.subr.mxu0 0.0
    %2404 = vmatpush2.xpose.msra.mxu0 0.0
    %2405 = vmatprep.subr.mxu0 0.0
    %2406 = vmatpush2.xpose.msra.mxu0 0.0
    %2407 = vmatprep.subr.mxu0 0.0
    %2408 = vmatpush2.xpose.msra.mxu0 0.0
    %2409 = vmatprep.subr.mxu0 0.0
    %2410 = vmatpush2.xpose.msra.mxu0 0.0
    %2411 = vmatprep.subr.mxu0 0.0
    %2412 = vmatpush2.xpose.msra.mxu0 0.0
    %2413 = vmatprep.subr.mxu0 0.0
    %2414 = vmatpush2.xpose.msra.mxu0 0.0
    %2415 = vmatprep.subr.mxu0 0.0
    %2416 = vmatpush2.xpose.msra.mxu0 0.0
    %2417 = vmatprep.subr.mxu0 0.0
    %2418 = vmatpush2.xpose.msra.mxu0 0.0
    %2419 = vmatprep.subr.mxu0 0.0
    %2420 = vmatpush2.xpose.msra.mxu0 0.0
    %2421 = vmatprep.subr.mxu0 0.0
    %2422 = vmatpush2.xpose.msra.mxu0 0.0
    %2423 = vmatprep.subr.mxu0 0.0
    %2424 = vmatpush2.xpose.msra.mxu0 0.0
    %2425 = vmatprep.mubr.f32.mxu0 0.0
    %2426 = vmatmul.mubr.f32.gmra.mxu0 %v2350
    %v2427 = vpop.f32.mrf.mxu0
    %v2428 = vadd.f32 %v2360, %v2427
    %v2429 = vpop.f32.mrf.mxu0
    %2430 = vdwg.mxu0
    %vm2431 = vcmask 122880
    %2432 = vst.msk [vmem:[#allocation11] sm:$0x1] %vm2431, %v2428
    // Predicated region
    $region54: #{tpu_custom_call.1} parent=1 // pred_check
      _
    $region55: #{tpu_custom_call.1} parent=1 // pred_check_branch
      %2434 = sbr.rel (0) target = $region57
    $region56: #{tpu_custom_call.1} parent=1 // pred_region
      %s2436 = ssub.s32 16, 16
      %2437 = vsyncadd [#allocation5], %s2436
      %s2439 = sshll.u32 [#allocation11], 4
      %s2440 = int_to_ptr.vmem [resolvable:$true] %s2439
      %2442 = dma.vmem_to_hbm [thread:$0]  %s2440, 16, %s9, [#allocation5]
    $region57: #{tpu_custom_call.1} parent=1 // pred_fallthru
      _
    // Predicated region
    $region58: #{tpu_custom_call.1} parent=1 // pred_check
      _
    $region59: #{tpu_custom_call.1} parent=1 // pred_check_branch
      %2444 = sbr.rel (0) target = $region61
    $region60: #{tpu_custom_call.1} parent=1 // pred_region
      %2445 = dma.done [#allocation5], 16
    $region61: #{tpu_custom_call.1} parent=1 // pred_fallthru
      _
    %2446 = vsyncpa [#allocation4], 1
    %2447 = vsyncpa [#allocation7], 1
    %2448 = vsyncpa [#allocation10], 1
    %2449 = vsyncpa [#allocation5], 1

</llo_original>
